<compile_context>
chip_gen: v7x
topology: tpu7x:2x2x1
jax: 0.10.0
libtpu: 0.0.40
codegen_flags: <defaults>
</compile_context>

<pallas_src>
import functools

import jax
import jax.numpy as jnp
import numpy as np
from jax.experimental import pallas as pl
from jax.experimental.pallas import tpu as pltpu


def _head_kernel(q_ref, k_ref, v_ref,
                 wq_ref, bq_ref, wk_ref, bk_ref, wv_ref, bv_ref,
                 o_ref):
    """Grid = (B, num_q_tiles).  One batch element, one query tile per step."""
    q = q_ref[0]          # (tq, D)  bf16
    k = k_ref[0]          # (S,  D)  bf16
    v = v_ref[0]          # (S,  D)  bf16

    # Linear projections: bf16 MXU inputs, f32 accumulation, f32 bias add.
    # The 1/sqrt(d_k) score scale is already folded into wq/bq (wrapper).
    qp = jnp.dot(q, wq_ref[...], preferred_element_type=jnp.float32) + bq_ref[...]  # (tq, d_k)
    kp = jnp.dot(k, wk_ref[...], preferred_element_type=jnp.float32) + bk_ref[...]  # (S,  d_k)
    vp = jnp.dot(v, wv_ref[...], preferred_element_type=jnp.float32) + bv_ref[...]  # (S,  d_v)

    # scores = (q Wq / sqrt(d_k)) @ (k Wk)^T
    scores = jnp.dot(qp.astype(jnp.bfloat16), kp.astype(jnp.bfloat16).T,
                     preferred_element_type=jnp.float32)                             # (tq, S)

    # TODO(synk): optional `mask` argument (masked_fill with -1e10) not plumbed
    # through; forward is implemented for mask=None.

    # Numerically stable softmax over the key axis (f32 elementwise).
    scores = scores - jnp.max(scores, axis=-1, keepdims=True)
    p = jnp.exp(scores)
    p = p * pl.reciprocal(jnp.sum(p, axis=-1, keepdims=True), approx=True)

    out = jnp.dot(p.astype(jnp.bfloat16), vp.astype(jnp.bfloat16),
                  preferred_element_type=jnp.float32)                                # (tq, d_v)
    o_ref[0] = out.astype(o_ref.dtype)


def head_attention(q, k, v, params, *, tq=128):
    """q, k, v: (B, S, d_model) float32.  Returns (B, S, d_v) float32."""
    wq, bq, wk, bk, wv, bv = params
    B, S, D = q.shape
    d_k = wq.shape[-1]
    d_v = wv.shape[-1]

    tq = min(tq, S)
    assert S % tq == 0, "sequence length must be a multiple of the query tile"

    # Fold 1/sqrt(d_k) into the q projection (free: done once in the wrapper).
    scale = 1.0 / (d_k ** 0.5)
    wq_s = wq * scale
    bq_s = (bq * scale).reshape(1, d_k).astype(jnp.float32)
    bk2 = bk.reshape(1, d_k).astype(jnp.float32)
    bv2 = bv.reshape(1, d_v).astype(jnp.float32)

    # bf16 at the MXU inputs / over HBM; f32 accumulation inside the kernel.
    q_b = q.astype(jnp.bfloat16)
    k_b = k.astype(jnp.bfloat16)
    v_b = v.astype(jnp.bfloat16)
    wq_b = wq_s.astype(jnp.bfloat16)
    wk_b = wk.astype(jnp.bfloat16)
    wv_b = wv.astype(jnp.bfloat16)

    grid = (B, S // tq)

    return pl.pallas_call(
        _head_kernel,
        out_shape=jax.ShapeDtypeStruct((B, S, d_v), jnp.float32),
        grid_spec=pltpu.PrefetchScalarGridSpec(
            num_scalar_prefetch=0,
            grid=grid,
            in_specs=[
                pl.BlockSpec((1, tq, D), lambda b, i: (b, i, 0)),   # q (query tile)
                pl.BlockSpec((1, S, D), lambda b, i: (b, 0, 0)),    # k (full sequence)
                pl.BlockSpec((1, S, D), lambda b, i: (b, 0, 0)),    # v (full sequence)
                pl.BlockSpec((D, d_k), lambda b, i: (0, 0)),        # Wq (pre-scaled)
                pl.BlockSpec((1, d_k), lambda b, i: (0, 0)),        # bq (pre-scaled)
                pl.BlockSpec((D, d_k), lambda b, i: (0, 0)),        # Wk
                pl.BlockSpec((1, d_k), lambda b, i: (0, 0)),        # bk
                pl.BlockSpec((D, d_v), lambda b, i: (0, 0)),        # Wv
                pl.BlockSpec((1, d_v), lambda b, i: (0, 0)),        # bv
            ],
            out_specs=pl.BlockSpec((1, tq, d_v), lambda b, i: (b, i, 0)),
        ),
        compiler_params=pltpu.CompilerParams(
            dimension_semantics=("parallel", "parallel"),
        ),
    )(q_b, k_b, v_b, wq_b, bq_s, wk_b, bk2, wv_b, bv2)


def reference(q, k, v, params):
    """Plain-JAX f32 reference matching the PyTorch module (mask=None)."""
    wq, bq, wk, bk, wv, bv = params
    d_k = wq.shape[-1]
    qp = q @ wq + bq
    kp = k @ wk + bk
    vp = v @ wv + bv
    scores = (qp @ jnp.swapaxes(kp, -2, -1)) / (d_k ** 0.5)
    p = jax.nn.softmax(scores, axis=-1)
    return p @ vp


def init_params(key, d_model, d_k, d_v):
    ks = jax.random.split(key, 6)
    scale = 0.05
    # nn.Linear(d_model, d_out): weight (d_out, d_model), forward = x @ W^T + b.
    # Stored pre-transposed as (d_model, d_out).
    wq = scale * jax.random.normal(ks[0], (d_model, d_k), jnp.float32)
    bq = scale * jax.random.normal(ks[1], (d_k,), jnp.float32)
    wk = scale * jax.random.normal(ks[2], (d_model, d_k), jnp.float32)
    bk = scale * jax.random.normal(ks[3], (d_k,), jnp.float32)
    wv = scale * jax.random.normal(ks[4], (d_model, d_v), jnp.float32)
    bv = scale * jax.random.normal(ks[5], (d_v,), jnp.float32)
    return (wq, bq, wk, bk, wv, bv)


if __name__ == "__main__":
    B, S = 2, 256
    d_model, d_k, d_v = 128, 64, 64

    root = jax.random.PRNGKey(0)
    kq, kk, kv, kp = jax.random.split(root, 4)
    q = jax.random.normal(kq, (B, S, d_model), jnp.float32)
    k = jax.random.normal(kk, (B, S, d_model), jnp.float32)
    v = jax.random.normal(kv, (B, S, d_model), jnp.float32)
    params = init_params(kp, d_model, d_k, d_v)

    out = head_attention(q, k, v, params)
    out = jax.block_until_ready(out)

    ref = reference(q, k, v, params)
    # Tolerance loosened vs. pure-f32 because MXU inputs are bf16 and the
    # softmax denominator uses the approx (EUP) reciprocal.
    np.testing.assert_allclose(np.asarray(out), np.asarray(ref), rtol=2e-2, atol=2e-2)

    print("KERNEL_OK")
</pallas_src>

<mosaic_0001>
module attributes {stable_mosaic.version = 11 : i64} {
  func.func @_head_kernel(%arg0: i32, %arg1: i32, %arg2: memref<1x128x128xbf16, #tpu.memory_space<vmem>>, %arg3: memref<1x256x128xbf16, #tpu.memory_space<vmem>>, %arg4: memref<1x256x128xbf16, #tpu.memory_space<vmem>>, %arg5: memref<128x64xbf16, #tpu.memory_space<vmem>>, %arg6: memref<1x64xf32, #tpu.memory_space<vmem>>, %arg7: memref<128x64xbf16, #tpu.memory_space<vmem>>, %arg8: memref<1x64xf32, #tpu.memory_space<vmem>>, %arg9: memref<128x64xbf16, #tpu.memory_space<vmem>>, %arg10: memref<1x64xf32, #tpu.memory_space<vmem>>, %arg11: memref<1x128x64xf32, #tpu.memory_space<vmem>>) attributes {dimension_semantics = [#tpu.dimension_semantics<parallel>, #tpu.dimension_semantics<parallel>], iteration_bounds = array<i64: 2, 2>, scalar_prefetch = 0 : i64, scratch_operands = 0 : i64, tpu.core_type = #tpu.core_type<tc>, window_params = [{transform_indices = @transform_0, window_bounds = array<i64: 1, 128, 128>}, {transform_indices = @transform_1, window_bounds = array<i64: 1, 256, 128>}, {transform_indices = @transform_2, window_bounds = array<i64: 1, 256, 128>}, {pipeline_mode = #tpu.pipeline_mode<synchronous>, transform_indices = @transform_3, window_bounds = array<i64: 128, 64>}, {pipeline_mode = #tpu.pipeline_mode<synchronous>, transform_indices = @transform_4, window_bounds = array<i64: 1, 64>}, {pipeline_mode = #tpu.pipeline_mode<synchronous>, transform_indices = @transform_5, window_bounds = array<i64: 128, 64>}, {pipeline_mode = #tpu.pipeline_mode<synchronous>, transform_indices = @transform_6, window_bounds = array<i64: 1, 64>}, {pipeline_mode = #tpu.pipeline_mode<synchronous>, transform_indices = @transform_7, window_bounds = array<i64: 128, 64>}, {pipeline_mode = #tpu.pipeline_mode<synchronous>, transform_indices = @transform_8, window_bounds = array<i64: 1, 64>}, {transform_indices = @transform_9, window_bounds = array<i64: 1, 128, 64>}]} {
    %c0 = arith.constant 0 : index
    %c0_0 = arith.constant 0 : index
    %c0_1 = arith.constant 0 : index
    %0 = vector.load %arg2[%c0, %c0_0, %c0_1] : memref<1x128x128xbf16, #tpu.memory_space<vmem>>, vector<1x128x128xbf16>
    %1 = vector.shape_cast %0 : vector<1x128x128xbf16> to vector<128x128xbf16>
    %c0_2 = arith.constant 0 : index
    %c0_3 = arith.constant 0 : index
    %c0_4 = arith.constant 0 : index
    %2 = vector.load %arg3[%c0_2, %c0_3, %c0_4] : memref<1x256x128xbf16, #tpu.memory_space<vmem>>, vector<1x256x128xbf16>
    %3 = vector.shape_cast %2 : vector<1x256x128xbf16> to vector<256x128xbf16>
    %c0_5 = arith.constant 0 : index
    %c0_6 = arith.constant 0 : index
    %c0_7 = arith.constant 0 : index
    %4 = vector.load %arg4[%c0_5, %c0_6, %c0_7] : memref<1x256x128xbf16, #tpu.memory_space<vmem>>, vector<1x256x128xbf16>
    %5 = vector.shape_cast %4 : vector<1x256x128xbf16> to vector<256x128xbf16>
    %c0_8 = arith.constant 0 : index
    %c0_9 = arith.constant 0 : index
    %6 = vector.load %arg5[%c0_8, %c0_9] : memref<128x64xbf16, #tpu.memory_space<vmem>>, vector<128x64xbf16>
    %cst = arith.constant dense<0.000000e+00> : vector<128x64xf32>
    %7 = tpu.matmul %1, %6, %cst {dimension_numbers = #tpu.dot_dimension_numbers<[1], [0], [0], [1], [0, 0, 1, 1], [], []>} : vector<128x128xbf16>, vector<128x64xbf16>, vector<128x64xf32> -> vector<128x64xf32>
    %c0_10 = arith.constant 0 : index
    %c0_11 = arith.constant 0 : index
    %8 = vector.load %arg6[%c0_10, %c0_11] : memref<1x64xf32, #tpu.memory_space<vmem>>, vector<1x64xf32>
    %9 = vector.broadcast %8 : vector<1x64xf32> to vector<128x64xf32>
    %10 = arith.addf %7, %9 : vector<128x64xf32>
    %c0_12 = arith.constant 0 : index
    %c0_13 = arith.constant 0 : index
    %11 = vector.load %arg7[%c0_12, %c0_13] : memref<128x64xbf16, #tpu.memory_space<vmem>>, vector<128x64xbf16>
    %cst_14 = arith.constant dense<0.000000e+00> : vector<256x64xf32>
    %12 = tpu.matmul %3, %11, %cst_14 {dimension_numbers = #tpu.dot_dimension_numbers<[1], [0], [0], [1], [0, 0, 1, 1], [], []>} : vector<256x128xbf16>, vector<128x64xbf16>, vector<256x64xf32> -> vector<256x64xf32>
    %c0_15 = arith.constant 0 : index
    %c0_16 = arith.constant 0 : index
    %13 = vector.load %arg8[%c0_15, %c0_16] : memref<1x64xf32, #tpu.memory_space<vmem>>, vector<1x64xf32>
    %14 = vector.broadcast %13 : vector<1x64xf32> to vector<256x64xf32>
    %15 = arith.addf %12, %14 : vector<256x64xf32>
    %c0_17 = arith.constant 0 : index
    %c0_18 = arith.constant 0 : index
    %16 = vector.load %arg9[%c0_17, %c0_18] : memref<128x64xbf16, #tpu.memory_space<vmem>>, vector<128x64xbf16>
    %cst_19 = arith.constant dense<0.000000e+00> : vector<256x64xf32>
    %17 = tpu.matmul %5, %16, %cst_19 {dimension_numbers = #tpu.dot_dimension_numbers<[1], [0], [0], [1], [0, 0, 1, 1], [], []>} : vector<256x128xbf16>, vector<128x64xbf16>, vector<256x64xf32> -> vector<256x64xf32>
    %c0_20 = arith.constant 0 : index
    %c0_21 = arith.constant 0 : index
    %18 = vector.load %arg10[%c0_20, %c0_21] : memref<1x64xf32, #tpu.memory_space<vmem>>, vector<1x64xf32>
    %19 = vector.broadcast %18 : vector<1x64xf32> to vector<256x64xf32>
    %20 = arith.addf %17, %19 : vector<256x64xf32>
    %21 = arith.truncf %10 : vector<128x64xf32> to vector<128x64xbf16>
    %22 = arith.truncf %15 : vector<256x64xf32> to vector<256x64xbf16>
    %23 = tpu.transpose %22, [1, 0] : vector<256x64xbf16> -> vector<64x256xbf16>
    %cst_22 = arith.constant dense<0.000000e+00> : vector<128x256xf32>
    %24 = tpu.matmul %21, %23, %cst_22 {dimension_numbers = #tpu.dot_dimension_numbers<[1], [0], [0], [1], [0, 0, 1, 1], [], []>} : vector<128x64xbf16>, vector<64x256xbf16>, vector<128x256xf32> -> vector<128x256xf32>
    %cst_23 = arith.constant dense<0xFF800000> : vector<128xf32>
    %25 = vector.multi_reduction <maximumf>, %24, %cst_23 [1] : vector<128x256xf32> to vector<128xf32>
    %26 = vector.shape_cast %25 : vector<128xf32> to vector<128x1xf32>
    %27 = vector.broadcast %26 : vector<128x1xf32> to vector<128x256xf32>
    %28 = arith.subf %24, %27 : vector<128x256xf32>
    %29 = math.exp %28 : vector<128x256xf32>
    %cst_24 = arith.constant dense<0.000000e+00> : vector<128xf32>
    %30 = vector.multi_reduction <add>, %29, %cst_24 [1] : vector<128x256xf32> to vector<128xf32>
    %31 = vector.shape_cast %30 : vector<128xf32> to vector<128x1xf32>
    %32 = tpu.reciprocal %31 {approx = true} : vector<128x1xf32> -> vector<128x1xf32>
    %33 = vector.broadcast %32 : vector<128x1xf32> to vector<128x256xf32>
    %34 = arith.mulf %29, %33 : vector<128x256xf32>
    %35 = arith.truncf %34 : vector<128x256xf32> to vector<128x256xbf16>
    %36 = arith.truncf %20 : vector<256x64xf32> to vector<256x64xbf16>
    %cst_25 = arith.constant dense<0.000000e+00> : vector<128x64xf32>
    %37 = tpu.matmul %35, %36, %cst_25 {dimension_numbers = #tpu.dot_dimension_numbers<[1], [0], [0], [1], [0, 0, 1, 1], [], []>} : vector<128x256xbf16>, vector<256x64xbf16>, vector<128x64xf32> -> vector<128x64xf32>
    %c0_26 = arith.constant 0 : index
    %c0_27 = arith.constant 0 : index
    %c0_28 = arith.constant 0 : index
    %38 = vector.load %arg11[%c0_26, %c0_27, %c0_28] : memref<1x128x64xf32, #tpu.memory_space<vmem>>, vector<1x128x64xf32>
    %39 = vector.shape_cast %38 : vector<1x128x64xf32> to vector<128x64xf32>
    %40 = vector.shape_cast %37 : vector<128x64xf32> to vector<1x128x64xf32>
    tpu.vector_store %arg11[%c0_26, %c0_27, %c0_28], %40 {strides = array<i32>} : memref<1x128x64xf32, #tpu.memory_space<vmem>>, vector<1x128x64xf32>,
    return
  }
  func.func @transform_0(%arg0: i32, %arg1: i32) -> (i32, i32, i32) {
    %c0_i32 = arith.constant 0 : i32
    %c0_i32_0 = arith.constant 0 : i32
    return %arg0, %arg1, %c0_i32 : i32, i32, i32
  }
  func.func @transform_1(%arg0: i32, %arg1: i32) -> (i32, i32, i32) {
    %c0_i32 = arith.constant 0 : i32
    %c0_i32_0 = arith.constant 0 : i32
    %c0_i32_1 = arith.constant 0 : i32
    return %arg0, %c0_i32, %c0_i32_0 : i32, i32, i32
  }
  func.func @transform_2(%arg0: i32, %arg1: i32) -> (i32, i32, i32) {
    %c0_i32 = arith.constant 0 : i32
    %c0_i32_0 = arith.constant 0 : i32
    %c0_i32_1 = arith.constant 0 : i32
    return %arg0, %c0_i32, %c0_i32_0 : i32, i32, i32
  }
  func.func @transform_3(%arg0: i32, %arg1: i32) -> (i32, i32) {
    %c0_i32 = arith.constant 0 : i32
    %c0_i32_0 = arith.constant 0 : i32
    %c0_i32_1 = arith.constant 0 : i32
    return %c0_i32, %c0_i32_0 : i32, i32
  }
  func.func @transform_4(%arg0: i32, %arg1: i32) -> (i32, i32) {
    %c0_i32 = arith.constant 0 : i32
    %c0_i32_0 = arith.constant 0 : i32
    %c0_i32_1 = arith.constant 0 : i32
    return %c0_i32, %c0_i32_0 : i32, i32
  }
  func.func @transform_5(%arg0: i32, %arg1: i32) -> (i32, i32) {
    %c0_i32 = arith.constant 0 : i32
    %c0_i32_0 = arith.constant 0 : i32
    %c0_i32_1 = arith.constant 0 : i32
    return %c0_i32, %c0_i32_0 : i32, i32
  }
  func.func @transform_6(%arg0: i32, %arg1: i32) -> (i32, i32) {
    %c0_i32 = arith.constant 0 : i32
    %c0_i32_0 = arith.constant 0 : i32
    %c0_i32_1 = arith.constant 0 : i32
    return %c0_i32, %c0_i32_0 : i32, i32
  }
  func.func @transform_7(%arg0: i32, %arg1: i32) -> (i32, i32) {
    %c0_i32 = arith.constant 0 : i32
    %c0_i32_0 = arith.constant 0 : i32
    %c0_i32_1 = arith.constant 0 : i32
    return %c0_i32, %c0_i32_0 : i32, i32
  }
  func.func @transform_8(%arg0: i32, %arg1: i32) -> (i32, i32) {
    %c0_i32 = arith.constant 0 : i32
    %c0_i32_0 = arith.constant 0 : i32
    %c0_i32_1 = arith.constant 0 : i32
    return %c0_i32, %c0_i32_0 : i32, i32
  }
  func.func @transform_9(%arg0: i32, %arg1: i32) -> (i32, i32, i32) {
    %c0_i32 = arith.constant 0 : i32
    %c0_i32_0 = arith.constant 0 : i32
    return %arg0, %arg1, %c0_i32 : i32, i32, i32
  }
}

</mosaic_0001>

<llo_original>
// kernel: tpu_custom_call.1
$region0: #{tpu_custom_call.1}
  #allocation0 [shape = 'u32[]', space=smem, size = 0x4, offset = 0x4, fixed_abs, tag = 'smem constant byte address 0x4 - core index']
  #allocation1 [shape = 'u32[144,128]{1,0:T(1,128)}', space=vmem, size = 0x12000, scoped, tag = 'internal scratch']
  %s0 = inlined_call_operand.vmem [shape: bf16[2,256,128], index: 0, kind: input, shape index: {}]
  %s1 = inlined_call_operand.hbm [shape: bf16[2,256,128], index: 1, kind: input, shape index: {}]
  %s2 = inlined_call_operand.hbm [shape: bf16[2,256,128], index: 2, kind: input, shape index: {}]
  %s3 = inlined_call_operand.vmem [shape: bf16[128,64], index: 3, kind: input, shape index: {}]
  %s4 = inlined_call_operand.vmem [shape: f32[1,64], index: 4, kind: input, shape index: {}]
  %s5 = inlined_call_operand.vmem [shape: bf16[128,64], index: 5, kind: input, shape index: {}]
  %s6 = inlined_call_operand.vmem [shape: f32[1,64], index: 6, kind: input, shape index: {}]
  %s7 = inlined_call_operand.vmem [shape: bf16[128,64], index: 7, kind: input, shape index: {}]
  %s8 = inlined_call_operand.vmem [shape: f32[1,64], index: 8, kind: input, shape index: {}]
  %s9 = inlined_call_operand.vmem [shape: f32[2,256,64], index: 9, kind: output, shape index: {}]
  %s10 = sld [smem:[#allocation0]]
  $region77: #{tpu_custom_call.1} parent=0
    _
  %s12 = ssub.s32 1, %s10
  %s13 = scalar_select 0, %s12, %s10
  $region1: #{tpu_custom_call.1} parent=0
    #allocation2 [shape = 'u8[131072]{0}', space=vmem, size = 0x20000, scoped, tag = 'input window, operand 1']
    #allocation3 [shape = 's32[2]{0}', space=sflag, size = 0x8, scoped, tag = 'scoped memory for tpu_custom_call.1']
    #allocation4 [shape = 'u8[131072]{0}', space=vmem, size = 0x20000, scoped, tag = 'input window, operand 2']
    #allocation5 [shape = 's32[2]{0}', space=sflag, size = 0x8, scoped, tag = 'scoped memory for tpu_custom_call.1']
    %14 = vsyncpa [#allocation3], 0
    %s15 = scalar_lea.sflag [#allocation3], 1
    %16 = vsyncpa %s15, 0
    %17 = vsyncpa [#allocation5], 0
    %s18 = scalar_lea.sflag [#allocation5], 1
    %19 = vsyncpa %s18, 0
    loop: start=0, step=1, limit=6
    $region2: #{tpu_custom_call.1} parent=1 // loop_pre_header
      _
    $region3: #{tpu_custom_call.1} parent=1 // loop_header
      %s21 = sphi 0, %s25
      %p22 = scmp.ge.s32.totalorder %s21, 6
      %s28 = sphi 0, %s40
      %s29 = sphi 0, %s36
      %s30 = sphi 0, %s28
      %s31 = sphi 0, %s29
      %s32 = sphi 0, %s30
      %s33 = sphi 0, %s31
      %s45 = sphi 0, %s47
      %s48 = sphi 0, %s45
      %s49 = sphi 0, %s48
      %s65 = sphi 0, %s49
      %s71 = sphi 0, %s73
      %s74 = sphi 0, %s71
      %s75 = sphi 0, %s74
      %s91 = sphi 0, %s75
      %s97 = sphi 0, %s99
      %s100 = sphi 0, %s97
      %s101 = sphi 0, %s100
      %s117 = sphi 0, %s101
      %s121 = sphi 0, %s121
      %s123 = sphi 0, %s121
      %s124 = sphi 0, %s123
      %s138 = sphi 0, %s124
      %s142 = sphi 0, %s142
      %s144 = sphi 0, %s142
      %s145 = sphi 0, %s144
      %s159 = sphi 0, %s145
      %s163 = sphi 0, %s163
      %s165 = sphi 0, %s163
      %s166 = sphi 0, %s165
      %s180 = sphi 0, %s166
      %s184 = sphi 0, %s184
      %s186 = sphi 0, %s184
      %s187 = sphi 0, %s186
      %s201 = sphi 0, %s187
      %s205 = sphi 0, %s205
      %s207 = sphi 0, %s205
      %s208 = sphi 0, %s207
      %s222 = sphi 0, %s208
      %s226 = sphi 0, %s226
      %s228 = sphi 0, %s226
      %s229 = sphi 0, %s228
      %s243 = sphi 0, %s229
      %s251 = sphi 0, %s253
      %s254 = sphi 0, %s251
      %s255 = sphi 0, %s254
      %s271 = sphi 0, %s255
    $region4: #{tpu_custom_call.1} parent=1 // loop_header_branch
      %24 = sbr.rel (%p22) target = $region8
    $region5: #{tpu_custom_call.1} parent=1 // loop_body
      %s26 = ssub.s32 %s21, 1
      %s27 = ssub.s32 %s21, 2
      %s34 = sadd.s32 1, %s29
      %p35 = scmp.ge.s32.totalorder %s34, 2
      %s36 = scalar_select %p35, 0, %s34
      %s37 = sadd.s32 1, %s28
      %s38 = scalar_select %p35, %s37, %s28
      %p39 = scmp.ge.s32.totalorder %s38, 2
      %s40 = scalar_select %p39, 0, %s38
      %s41 = ssub.s32 %s28, %s40
      %s42 = ssub.s32 %s29, %s36
      %s43 = sor.u32 %s41, %s42
      %p44 = scmp.eq.s32.totalorder %s43, 0
      %s46 = sadd.s32 %s45, 1
      %s47 = scalar_select %p44, %s45, %s46
      %p50 = pneg %p44
      %p51 = scmp.eq.s32.totalorder %s21, 3
      %p52 = por %p50, %p51
      %p53 = scmp.ne.s32.totalorder %s45, %s48
      %p54 = scmp.eq.s32.totalorder %s21, 0
      %p55 = por %p53, %p54
      %p56 = scmp.ne.s32.totalorder %s45, %s48
      %p57 = scmp.eq.s32.totalorder %s26, 3
      %p58 = por %p56, %p57
      %p59 = scmp.ne.s32.totalorder %s48, %s49
      %p60 = scmp.eq.s32.totalorder %s26, 0
      %p61 = por %p59, %p60
      %p62 = scmp.ne.s32.totalorder %s48, %s49
      %p63 = scmp.eq.s32.totalorder %s27, 3
      %p64 = por %p62, %p63
      %p66 = scmp.ne.s32.totalorder %s49, %s65
      %p67 = scmp.eq.s32.totalorder %s27, 0
      %p68 = por %p66, %p67
      %s69 = ssub.s32 %s28, %s40
      %p70 = scmp.eq.s32.totalorder %s69, 0
      %s72 = sadd.s32 %s71, 1
      %s73 = scalar_select %p70, %s71, %s72
      %p76 = pneg %p70
      %p77 = scmp.eq.s32.totalorder %s21, 3
      %p78 = por %p76, %p77
      %p79 = scmp.ne.s32.totalorder %s71, %s74
      %p80 = scmp.eq.s32.totalorder %s21, 0
      %p81 = por %p79, %p80
      %p82 = scmp.ne.s32.totalorder %s71, %s74
      %p83 = scmp.eq.s32.totalorder %s26, 3
      %p84 = por %p82, %p83
      %p85 = scmp.ne.s32.totalorder %s74, %s75
      %p86 = scmp.eq.s32.totalorder %s26, 0
      %p87 = por %p85, %p86
      %p88 = scmp.ne.s32.totalorder %s74, %s75
      %p89 = scmp.eq.s32.totalorder %s27, 3
      %p90 = por %p88, %p89
      %p92 = scmp.ne.s32.totalorder %s75, %s91
      %p93 = scmp.eq.s32.totalorder %s27, 0
      %p94 = por %p92, %p93
      %s95 = ssub.s32 %s28, %s40
      %p96 = scmp.eq.s32.totalorder %s95, 0
      %s98 = sadd.s32 %s97, 1
      %s99 = scalar_select %p96, %s97, %s98
      %p102 = pneg %p96
      %p103 = scmp.eq.s32.totalorder %s21, 3
      %p104 = por %p102, %p103
      %p105 = scmp.ne.s32.totalorder %s97, %s100
      %p106 = scmp.eq.s32.totalorder %s21, 0
      %p107 = por %p105, %p106
      %p108 = scmp.ne.s32.totalorder %s97, %s100
      %p109 = scmp.eq.s32.totalorder %s26, 3
      %p110 = por %p108, %p109
      %p111 = scmp.ne.s32.totalorder %s100, %s101
      %p112 = scmp.eq.s32.totalorder %s26, 0
      %p113 = por %p111, %p112
      %p114 = scmp.ne.s32.totalorder %s100, %s101
      %p115 = scmp.eq.s32.totalorder %s27, 3
      %p116 = por %p114, %p115
      %p118 = scmp.ne.s32.totalorder %s101, %s117
      %p119 = scmp.eq.s32.totalorder %s27, 0
      %p120 = por %p118, %p119
      %s122 = sadd.s32 %s121, 1
      %p125 = scmp.eq.s32.totalorder %s21, 3
      %p126 = scmp.ne.s32.totalorder %s121, %s123
      %p127 = scmp.eq.s32.totalorder %s21, 0
      %p128 = por %p126, %p127
      %p129 = scmp.ne.s32.totalorder %s121, %s123
      %p130 = scmp.eq.s32.totalorder %s26, 3
      %p131 = por %p129, %p130
      %p132 = scmp.ne.s32.totalorder %s123, %s124
      %p133 = scmp.eq.s32.totalorder %s26, 0
      %p134 = por %p132, %p133
      %p135 = scmp.ne.s32.totalorder %s123, %s124
      %p136 = scmp.eq.s32.totalorder %s27, 3
      %p137 = por %p135, %p136
      %p139 = scmp.ne.s32.totalorder %s124, %s138
      %p140 = scmp.eq.s32.totalorder %s27, 0
      %p141 = por %p139, %p140
      %s143 = sadd.s32 %s142, 1
      %p146 = scmp.eq.s32.totalorder %s21, 3
      %p147 = scmp.ne.s32.totalorder %s142, %s144
      %p148 = scmp.eq.s32.totalorder %s21, 0
      %p149 = por %p147, %p148
      %p150 = scmp.ne.s32.totalorder %s142, %s144
      %p151 = scmp.eq.s32.totalorder %s26, 3
      %p152 = por %p150, %p151
      %p153 = scmp.ne.s32.totalorder %s144, %s145
      %p154 = scmp.eq.s32.totalorder %s26, 0
      %p155 = por %p153, %p154
      %p156 = scmp.ne.s32.totalorder %s144, %s145
      %p157 = scmp.eq.s32.totalorder %s27, 3
      %p158 = por %p156, %p157
      %p160 = scmp.ne.s32.totalorder %s145, %s159
      %p161 = scmp.eq.s32.totalorder %s27, 0
      %p162 = por %p160, %p161
      %s164 = sadd.s32 %s163, 1
      %p167 = scmp.eq.s32.totalorder %s21, 3
      %p168 = scmp.ne.s32.totalorder %s163, %s165
      %p169 = scmp.eq.s32.totalorder %s21, 0
      %p170 = por %p168, %p169
      %p171 = scmp.ne.s32.totalorder %s163, %s165
      %p172 = scmp.eq.s32.totalorder %s26, 3
      %p173 = por %p171, %p172
      %p174 = scmp.ne.s32.totalorder %s165, %s166
      %p175 = scmp.eq.s32.totalorder %s26, 0
      %p176 = por %p174, %p175
      %p177 = scmp.ne.s32.totalorder %s165, %s166
      %p178 = scmp.eq.s32.totalorder %s27, 3
      %p179 = por %p177, %p178
      %p181 = scmp.ne.s32.totalorder %s166, %s180
      %p182 = scmp.eq.s32.totalorder %s27, 0
      %p183 = por %p181, %p182
      %s185 = sadd.s32 %s184, 1
      %p188 = scmp.eq.s32.totalorder %s21, 3
      %p189 = scmp.ne.s32.totalorder %s184, %s186
      %p190 = scmp.eq.s32.totalorder %s21, 0
      %p191 = por %p189, %p190
      %p192 = scmp.ne.s32.totalorder %s184, %s186
      %p193 = scmp.eq.s32.totalorder %s26, 3
      %p194 = por %p192, %p193
      %p195 = scmp.ne.s32.totalorder %s186, %s187
      %p196 = scmp.eq.s32.totalorder %s26, 0
      %p197 = por %p195, %p196
      %p198 = scmp.ne.s32.totalorder %s186, %s187
      %p199 = scmp.eq.s32.totalorder %s27, 3
      %p200 = por %p198, %p199
      %p202 = scmp.ne.s32.totalorder %s187, %s201
      %p203 = scmp.eq.s32.totalorder %s27, 0
      %p204 = por %p202, %p203
      %s206 = sadd.s32 %s205, 1
      %p209 = scmp.eq.s32.totalorder %s21, 3
      %p210 = scmp.ne.s32.totalorder %s205, %s207
      %p211 = scmp.eq.s32.totalorder %s21, 0
      %p212 = por %p210, %p211
      %p213 = scmp.ne.s32.totalorder %s205, %s207
      %p214 = scmp.eq.s32.totalorder %s26, 3
      %p215 = por %p213, %p214
      %p216 = scmp.ne.s32.totalorder %s207, %s208
      %p217 = scmp.eq.s32.totalorder %s26, 0
      %p218 = por %p216, %p217
      %p219 = scmp.ne.s32.totalorder %s207, %s208
      %p220 = scmp.eq.s32.totalorder %s27, 3
      %p221 = por %p219, %p220
      %p223 = scmp.ne.s32.totalorder %s208, %s222
      %p224 = scmp.eq.s32.totalorder %s27, 0
      %p225 = por %p223, %p224
      %s227 = sadd.s32 %s226, 1
      %p230 = scmp.eq.s32.totalorder %s21, 3
      %p231 = scmp.ne.s32.totalorder %s226, %s228
      %p232 = scmp.eq.s32.totalorder %s21, 0
      %p233 = por %p231, %p232
      %p234 = scmp.ne.s32.totalorder %s226, %s228
      %p235 = scmp.eq.s32.totalorder %s26, 3
      %p236 = por %p234, %p235
      %p237 = scmp.ne.s32.totalorder %s228, %s229
      %p238 = scmp.eq.s32.totalorder %s26, 0
      %p239 = por %p237, %p238
      %p240 = scmp.ne.s32.totalorder %s228, %s229
      %p241 = scmp.eq.s32.totalorder %s27, 3
      %p242 = por %p240, %p241
      %p244 = scmp.ne.s32.totalorder %s229, %s243
      %p245 = scmp.eq.s32.totalorder %s27, 0
      %p246 = por %p244, %p245
      %s247 = ssub.s32 %s28, %s40
      %s248 = ssub.s32 %s29, %s36
      %s249 = sor.u32 %s247, %s248
      %p250 = scmp.eq.s32.totalorder %s249, 0
      %s252 = sadd.s32 %s251, 1
      %s253 = scalar_select %p250, %s251, %s252
      %p256 = pneg %p250
      %p257 = scmp.eq.s32.totalorder %s21, 3
      %p258 = por %p256, %p257
      %p259 = scmp.ne.s32.totalorder %s251, %s254
      %p260 = scmp.eq.s32.totalorder %s21, 0
      %p261 = por %p259, %p260
      %p262 = scmp.ne.s32.totalorder %s251, %s254
      %p263 = scmp.eq.s32.totalorder %s26, 3
      %p264 = por %p262, %p263
      %p265 = scmp.ne.s32.totalorder %s254, %s255
      %p266 = scmp.eq.s32.totalorder %s26, 0
      %p267 = por %p265, %p266
      %p268 = scmp.ne.s32.totalorder %s254, %s255
      %p269 = scmp.eq.s32.totalorder %s27, 3
      %p270 = por %p268, %p269
      %p272 = scmp.ne.s32.totalorder %s255, %s271
      %p273 = scmp.eq.s32.totalorder %s27, 0
      %p274 = por %p272, %p273
      %p275 = scmp.le.s32.totalorder 1, %s21
      %p276 = scmp.lt.s32.totalorder %s21, 5
      %p277 = pnand %p275, %p276
      %p278 = pneg %p277
      // Predicated region
      $region9: #{tpu_custom_call.1} parent=5 // pred_check
        _
      $region10: #{tpu_custom_call.1} parent=5 // pred_check_branch
        %280 = sbr.rel (%p277) target = $region12
      $region11: #{tpu_custom_call.1} parent=5 // pred_region
        %s281 = ssub.s32 %s21, 1
        // Predicated region
        $region13: #{tpu_custom_call.1} parent=11 // pred_check
          %p282 = pneg %p134
        $region14: #{tpu_custom_call.1} parent=11 // pred_check_branch
          %284 = sbr.rel (%p282) target = $region16
        $region15: #{tpu_custom_call.1} parent=11 // pred_region
          _
        $region16: #{tpu_custom_call.1} parent=11 // pred_fallthru
          _
        // Predicated region
        $region17: #{tpu_custom_call.1} parent=11 // pred_check
          %p285 = pneg %p155
        $region18: #{tpu_custom_call.1} parent=11 // pred_check_branch
          %287 = sbr.rel (%p285) target = $region20
        $region19: #{tpu_custom_call.1} parent=11 // pred_region
          _
        $region20: #{tpu_custom_call.1} parent=11 // pred_fallthru
          _
        // Predicated region
        $region21: #{tpu_custom_call.1} parent=11 // pred_check
          %p288 = pneg %p176
        $region22: #{tpu_custom_call.1} parent=11 // pred_check_branch
          %290 = sbr.rel (%p288) target = $region24
        $region23: #{tpu_custom_call.1} parent=11 // pred_region
          _
        $region24: #{tpu_custom_call.1} parent=11 // pred_fallthru
          _
        // Predicated region
        $region25: #{tpu_custom_call.1} parent=11 // pred_check
          %p291 = pneg %p197
        $region26: #{tpu_custom_call.1} parent=11 // pred_check_branch
          %293 = sbr.rel (%p291) target = $region28
        $region27: #{tpu_custom_call.1} parent=11 // pred_region
          _
        $region28: #{tpu_custom_call.1} parent=11 // pred_fallthru
          _
        // Predicated region
        $region29: #{tpu_custom_call.1} parent=11 // pred_check
          %p294 = pneg %p218
        $region30: #{tpu_custom_call.1} parent=11 // pred_check_branch
          %296 = sbr.rel (%p294) target = $region32
        $region31: #{tpu_custom_call.1} parent=11 // pred_region
          _
        $region32: #{tpu_custom_call.1} parent=11 // pred_fallthru
          _
        // Predicated region
        $region33: #{tpu_custom_call.1} parent=11 // pred_check
          %p297 = pneg %p239
        $region34: #{tpu_custom_call.1} parent=11 // pred_check_branch
          %299 = sbr.rel (%p297) target = $region36
        $region35: #{tpu_custom_call.1} parent=11 // pred_region
          _
        $region36: #{tpu_custom_call.1} parent=11 // pred_fallthru
          _
      $region12: #{tpu_custom_call.1} parent=5 // pred_fallthru
        _
      %p300 = scmp.lt.s32.totalorder %s21, 4
      // Predicated region
      $region37: #{tpu_custom_call.1} parent=5 // pred_check
        %p301 = pneg %p300
      $region38: #{tpu_custom_call.1} parent=5 // pred_check_branch
        %303 = sbr.rel (%p301) target = $region40
      $region39: #{tpu_custom_call.1} parent=5 // pred_region
        // Predicated region
        $region41: #{tpu_custom_call.1} parent=39 // pred_check
          %p304 = pneg %p55
        $region42: #{tpu_custom_call.1} parent=39 // pred_check_branch
          %306 = sbr.rel (%p304) target = $region44
        $region43: #{tpu_custom_call.1} parent=39 // pred_region
          %s307 = smul.u32 16, %s29
          %p308 = scmp.lt.s32.totalorder %s28, 1
          %s309 = scalar_select %p308, %s28, 1
          %p310 = scmp.lt.s32.totalorder %s307, 31
          %s311 = scalar_select %p310, %s307, 31
          %s312 = smul.addr %s309, 32
          %s313 = sadd.s32 %s311, %s312
          %s314 = smul.addr %s313, 4
          %s315 = scalar_lea.vmem %s0, %s314
          %s316 = smul.u32 16, %s29
        $region44: #{tpu_custom_call.1} parent=39 // pred_fallthru
          _
        // Predicated region
        $region45: #{tpu_custom_call.1} parent=39 // pred_check
          %p317 = pneg %p81
        $region46: #{tpu_custom_call.1} parent=39 // pred_check_branch
          %319 = sbr.rel (%p317) target = $region48
        $region47: #{tpu_custom_call.1} parent=39 // pred_region
          %s320 = sand.u32 %s71, 1
          %s321 = scalar_lea.sflag [#allocation3], %s320
          %s322 = sand.u32 %s71, 1
          %s323 = smul.addr %s322, 128
          %s324 = scalar_lea.vmem [#allocation2], %s323
          %s326 = ssub.s32 2048, 2048
          %327 = vsyncadd %s321, %s326
          %s328 = smul.addr %s28, 32
          %s329 = smul.addr %s328, 64
          %s330 = scalar_lea.hbm %s1, %s329
          %s331 = sshll.u32 %s324, 4
          %s332 = int_to_ptr.vmem [resolvable:$true] %s331
          %337 = dma.hbm_to_vmem [thread:$0]  %s330, 2048, %s332, %s321, 64, 64, 4
        $region48: #{tpu_custom_call.1} parent=39 // pred_fallthru
          _
        // Predicated region
        $region49: #{tpu_custom_call.1} parent=39 // pred_check
          %p338 = pneg %p107
        $region50: #{tpu_custom_call.1} parent=39 // pred_check_branch
          %340 = sbr.rel (%p338) target = $region52
        $region51: #{tpu_custom_call.1} parent=39 // pred_region
          %s341 = sand.u32 %s97, 1
          %s342 = scalar_lea.sflag [#allocation5], %s341
          %s343 = sand.u32 %s97, 1
          %s344 = smul.addr %s343, 128
          %s345 = scalar_lea.vmem [#allocation4], %s344
          %s347 = ssub.s32 2048, 2048
          %348 = vsyncadd %s342, %s347
          %s349 = smul.addr %s28, 32
          %s350 = smul.addr %s349, 64
          %s351 = scalar_lea.hbm %s2, %s350
          %s352 = sshll.u32 %s345, 4
          %s353 = int_to_ptr.vmem [resolvable:$true] %s352
          %358 = dma.hbm_to_vmem [thread:$0]  %s351, 2048, %s353, %s342, 64, 64, 4
        $region52: #{tpu_custom_call.1} parent=39 // pred_fallthru
          _
      $region40: #{tpu_custom_call.1} parent=5 // pred_fallthru
        _
      %p359 = scmp.le.s32.totalorder 1, %s21
      %p360 = scmp.lt.s32.totalorder %s21, 5
      %p361 = pnand %p359, %p360
      %p362 = pneg %p361
      // Predicated region
      $region53: #{tpu_custom_call.1} parent=5 // pred_check
        _
      $region54: #{tpu_custom_call.1} parent=5 // pred_check_branch
        %364 = sbr.rel (%p361) target = $region56
      $region55: #{tpu_custom_call.1} parent=5 // pred_region
        %s365 = ssub.s32 %s21, 1
        %s366 = sand.u32 %s74, 1
        %s367 = scalar_lea.sflag [#allocation3], %s366
        %s368 = sand.u32 %s74, 1
        %s369 = smul.addr %s368, 128
        %s370 = scalar_lea.vmem [#allocation2], %s369
        // Predicated region
        $region57: #{tpu_custom_call.1} parent=55 // pred_check
          %p371 = pneg %p87
        $region58: #{tpu_custom_call.1} parent=55 // pred_check_branch
          %373 = sbr.rel (%p371) target = $region60
        $region59: #{tpu_custom_call.1} parent=55 // pred_region
          %374 = dma.done %s367, 2048
        $region60: #{tpu_custom_call.1} parent=55 // pred_fallthru
          _
        %s375 = sand.u32 %s100, 1
        %s376 = scalar_lea.sflag [#allocation5], %s375
        %s377 = sand.u32 %s100, 1
        %s378 = smul.addr %s377, 128
        %s379 = scalar_lea.vmem [#allocation4], %s378
        // Predicated region
        $region61: #{tpu_custom_call.1} parent=55 // pred_check
          %p380 = pneg %p113
        $region62: #{tpu_custom_call.1} parent=55 // pred_check_branch
          %382 = sbr.rel (%p380) target = $region64
        $region63: #{tpu_custom_call.1} parent=55 // pred_region
          %383 = dma.done %s376, 2048
        $region64: #{tpu_custom_call.1} parent=55 // pred_fallthru
          _
        %s384 = smul.u32 16, %s31
        %p385 = scmp.lt.s32.totalorder %s30, 1
        %s386 = scalar_select %p385, %s30, 1
        %p387 = scmp.lt.s32.totalorder %s384, 31
        %s388 = scalar_select %p387, %s384, 31
        %s389 = smul.addr %s386, 32
        %s390 = sadd.s32 %s388, %s389
        %s391 = smul.addr %s390, 4
        %s392 = scalar_lea.vmem %s0, %s391
        %p393 = pneg %p61
        %p394 = pneg %p58
        %s395 = sand.u32 %s74, 1
        %s396 = scalar_lea.sflag [#allocation3], %s395
        %s397 = sand.u32 %s74, 1
        %s398 = smul.addr %s397, 128
        %s399 = scalar_lea.vmem [#allocation2], %s398
        %p400 = pneg %p87
        %p401 = pneg %p84
        %s402 = sand.u32 %s100, 1
        %s403 = scalar_lea.sflag [#allocation5], %s402
        %s404 = sand.u32 %s100, 1
        %s405 = smul.addr %s404, 128
        %s406 = scalar_lea.vmem [#allocation4], %s405
        %p407 = pneg %p113
        %p408 = pneg %p110
        %p409 = pneg %p134
        %p410 = pneg %p131
        %p411 = pneg %p155
        %p412 = pneg %p152
        %p413 = pneg %p176
        %p414 = pneg %p173
        %p415 = pneg %p197
        %p416 = pneg %p194
        %p417 = pneg %p218
        %p418 = pneg %p215
        %p419 = pneg %p239
        %p420 = pneg %p236
        %p421 = pneg %p267
        %p422 = pneg %p264
        %s423 = smul.u32 16, %s31
        %p424 = scmp.lt.s32.totalorder %s30, 1
        %s425 = scalar_select %p424, %s30, 1
        %p426 = scmp.lt.s32.totalorder %s423, 31
        %s427 = scalar_select %p426, %s423, 31
        %s428 = smul.addr %s425, 32
        %s429 = sadd.s32 %s427, %s428
        %s430 = smul.addr %s429, 8
        %s431 = scalar_lea.vmem %s9, %s430
        %s432 = smul.u32 16, %s31
        %p433 = scmp.lt.s32.totalorder %s30, 1
        %s434 = scalar_select %p433, %s30, 1
        %p435 = scmp.lt.s32.totalorder %s432, 31
        %s436 = scalar_select %p435, %s432, 31
        %s437 = smul.addr %s434, 32
        %s438 = sadd.s32 %s436, %s437
        %s439 = smul.addr %s438, 4
        %s440 = scalar_lea.vmem %s0, %s439
        %s441 = smul.u32 16, %s31
        %s442 = smul.u32 16, %s31
        %p443 = scmp.lt.s32.totalorder %s30, 1
        %s444 = scalar_select %p443, %s30, 1
        %p445 = scmp.lt.s32.totalorder %s442, 31
        %s446 = scalar_select %p445, %s442, 31
        %s447 = smul.addr %s444, 32
        %s448 = sadd.s32 %s446, %s447
        %s449 = smul.addr %s448, 8
        %s450 = scalar_lea.vmem %s9, %s449
        %s451 = smul.u32 16, %s31
        %v453 = vld [vmem:[%s440] sm:$0xf]
        %v454 = vld [vmem:[%s440 + $0x4] sm:$0xf]
        %v455 = vld [vmem:[%s440 + $0x8] sm:$0xf]
        %v456 = vld [vmem:[%s440 + $0xc] sm:$0xf]
        %v457 = vld [vmem:[%s440 + $0x10] sm:$0xf]
        %v458 = vld [vmem:[%s440 + $0x14] sm:$0xf]
        %v459 = vld [vmem:[%s440 + $0x18] sm:$0xf]
        %v460 = vld [vmem:[%s440 + $0x1c] sm:$0xf]
        %v461 = vld [vmem:[%s440 + $0x20] sm:$0xf]
        %v462 = vld [vmem:[%s440 + $0x24] sm:$0xf]
        %v463 = vld [vmem:[%s440 + $0x28] sm:$0xf]
        %v464 = vld [vmem:[%s440 + $0x2c] sm:$0xf]
        %v465 = vld [vmem:[%s440 + $0x30] sm:$0xf]
        %v466 = vld [vmem:[%s440 + $0x34] sm:$0xf]
        %v467 = vld [vmem:[%s440 + $0x38] sm:$0xf]
        %v468 = vld [vmem:[%s440 + $0x3c] sm:$0xf]
        %v469 = vld [vmem:[%s370] sm:$0xf]
        %v470 = vld [vmem:[%s370 + $0x4] sm:$0xf]
        %v471 = vld [vmem:[%s370 + $0x8] sm:$0xf]
        %v472 = vld [vmem:[%s370 + $0xc] sm:$0xf]
        %v473 = vld [vmem:[%s370 + $0x10] sm:$0xf]
        %v474 = vld [vmem:[%s370 + $0x14] sm:$0xf]
        %v475 = vld [vmem:[%s370 + $0x18] sm:$0xf]
        %v476 = vld [vmem:[%s370 + $0x1c] sm:$0xf]
        %v477 = vld [vmem:[%s370 + $0x20] sm:$0xf]
        %v478 = vld [vmem:[%s370 + $0x24] sm:$0xf]
        %v479 = vld [vmem:[%s370 + $0x28] sm:$0xf]
        %v480 = vld [vmem:[%s370 + $0x2c] sm:$0xf]
        %v481 = vld [vmem:[%s370 + $0x30] sm:$0xf]
        %v482 = vld [vmem:[%s370 + $0x34] sm:$0xf]
        %v483 = vld [vmem:[%s370 + $0x38] sm:$0xf]
        %v484 = vld [vmem:[%s370 + $0x3c] sm:$0xf]
        %v485 = vld [vmem:[%s370 + $0x40] sm:$0xf]
        %v486 = vld [vmem:[%s370 + $0x44] sm:$0xf]
        %v487 = vld [vmem:[%s370 + $0x48] sm:$0xf]
        %v488 = vld [vmem:[%s370 + $0x4c] sm:$0xf]
        %v489 = vld [vmem:[%s370 + $0x50] sm:$0xf]
        %v490 = vld [vmem:[%s370 + $0x54] sm:$0xf]
        %v491 = vld [vmem:[%s370 + $0x58] sm:$0xf]
        %v492 = vld [vmem:[%s370 + $0x5c] sm:$0xf]
        %v493 = vld [vmem:[%s370 + $0x60] sm:$0xf]
        %v494 = vld [vmem:[%s370 + $0x64] sm:$0xf]
        %v495 = vld [vmem:[%s370 + $0x68] sm:$0xf]
        %v496 = vld [vmem:[%s370 + $0x6c] sm:$0xf]
        %v497 = vld [vmem:[%s370 + $0x70] sm:$0xf]
        %v498 = vld [vmem:[%s370 + $0x74] sm:$0xf]
        %v499 = vld [vmem:[%s370 + $0x78] sm:$0xf]
        %v500 = vld [vmem:[%s370 + $0x7c] sm:$0xf]
        %v501 = vld [vmem:[%s379] sm:$0xf]
        %v502 = vld [vmem:[%s379 + $0x4] sm:$0xf]
        %v503 = vld [vmem:[%s379 + $0x8] sm:$0xf]
        %v504 = vld [vmem:[%s379 + $0xc] sm:$0xf]
        %v505 = vld [vmem:[%s379 + $0x10] sm:$0xf]
        %v506 = vld [vmem:[%s379 + $0x14] sm:$0xf]
        %v507 = vld [vmem:[%s379 + $0x18] sm:$0xf]
        %v508 = vld [vmem:[%s379 + $0x1c] sm:$0xf]
        %v509 = vld [vmem:[%s379 + $0x20] sm:$0xf]
        %v510 = vld [vmem:[%s379 + $0x24] sm:$0xf]
        %v511 = vld [vmem:[%s379 + $0x28] sm:$0xf]
        %v512 = vld [vmem:[%s379 + $0x2c] sm:$0xf]
        %v513 = vld [vmem:[%s379 + $0x30] sm:$0xf]
        %v514 = vld [vmem:[%s379 + $0x34] sm:$0xf]
        %v515 = vld [vmem:[%s379 + $0x38] sm:$0xf]
        %v516 = vld [vmem:[%s379 + $0x3c] sm:$0xf]
        %v517 = vld [vmem:[%s379 + $0x40] sm:$0xf]
        %v518 = vld [vmem:[%s379 + $0x44] sm:$0xf]
        %v519 = vld [vmem:[%s379 + $0x48] sm:$0xf]
        %v520 = vld [vmem:[%s379 + $0x4c] sm:$0xf]
        %v521 = vld [vmem:[%s379 + $0x50] sm:$0xf]
        %v522 = vld [vmem:[%s379 + $0x54] sm:$0xf]
        %v523 = vld [vmem:[%s379 + $0x58] sm:$0xf]
        %v524 = vld [vmem:[%s379 + $0x5c] sm:$0xf]
        %v525 = vld [vmem:[%s379 + $0x60] sm:$0xf]
        %v526 = vld [vmem:[%s379 + $0x64] sm:$0xf]
        %v527 = vld [vmem:[%s379 + $0x68] sm:$0xf]
        %v528 = vld [vmem:[%s379 + $0x6c] sm:$0xf]
        %v529 = vld [vmem:[%s379 + $0x70] sm:$0xf]
        %v530 = vld [vmem:[%s379 + $0x74] sm:$0xf]
        %v531 = vld [vmem:[%s379 + $0x78] sm:$0xf]
        %v532 = vld [vmem:[%s379 + $0x7c] sm:$0xf]
        %v533 = vld [vmem:[%s3] sm:$0xf]
        %v534 = vld [vmem:[%s3 + $0x4] sm:$0xf]
        %v535 = vld [vmem:[%s3 + $0x8] sm:$0xf]
        %v536 = vld [vmem:[%s3 + $0xc] sm:$0xf]
        %v537 = vld [vmem:[%s3 + $0x10] sm:$0xf]
        %v538 = vld [vmem:[%s3 + $0x14] sm:$0xf]
        %v539 = vld [vmem:[%s3 + $0x18] sm:$0xf]
        %v540 = vld [vmem:[%s3 + $0x1c] sm:$0xf]
        %v541 = vld [vmem:[%s3 + $0x20] sm:$0xf]
        %v542 = vld [vmem:[%s3 + $0x24] sm:$0xf]
        %v543 = vld [vmem:[%s3 + $0x28] sm:$0xf]
        %v544 = vld [vmem:[%s3 + $0x2c] sm:$0xf]
        %v545 = vld [vmem:[%s3 + $0x30] sm:$0xf]
        %v546 = vld [vmem:[%s3 + $0x34] sm:$0xf]
        %v547 = vld [vmem:[%s3 + $0x38] sm:$0xf]
        %v548 = vld [vmem:[%s3 + $0x3c] sm:$0xf]
        %v549 = vld [vmem:[%s4] sm:$0x1]
        %v551 = vlaneseq
        %v552 = vshrl.u32 %v551, 7
        %v553 = vsub.s32 0, %v552
        %v554 = vrot.slane %v549, %v553
        %v572 = vunpack.c.l.b16 %v453
        %v573 = vunpack.c.l.b16 %v454
        %v574 = vunpack.c.l.b16 %v455
        %v575 = vunpack.c.l.b16 %v456
        %v576 = vunpack.c.l.b16 %v457
        %v577 = vunpack.c.l.b16 %v458
        %v578 = vunpack.c.l.b16 %v459
        %v579 = vunpack.c.l.b16 %v460
        %v580 = vunpack.c.l.b16 %v461
        %v581 = vunpack.c.l.b16 %v462
        %v582 = vunpack.c.l.b16 %v463
        %v583 = vunpack.c.l.b16 %v464
        %v584 = vunpack.c.l.b16 %v465
        %v585 = vunpack.c.l.b16 %v466
        %v586 = vunpack.c.l.b16 %v467
        %v587 = vunpack.c.l.b16 %v468
        %v588 = vpack.c.b16 %v573, %v572
        %v589 = vpack.c.b16 %v575, %v574
        %v590 = vpack.c.b16 %v577, %v576
        %v591 = vpack.c.b16 %v579, %v578
        %v592 = vpack.c.b16 %v581, %v580
        %v593 = vpack.c.b16 %v583, %v582
        %v594 = vpack.c.b16 %v585, %v584
        %v595 = vpack.c.b16 %v587, %v586
        %v620 = vunpack.c.l.b16 %v533
        %v621 = vunpack.c.l.b16 %v534
        %v622 = vunpack.c.l.b16 %v535
        %v623 = vunpack.c.l.b16 %v536
        %v624 = vunpack.c.l.b16 %v537
        %v625 = vunpack.c.l.b16 %v538
        %v626 = vunpack.c.l.b16 %v539
        %v627 = vunpack.c.l.b16 %v540
        %v628 = vunpack.c.l.b16 %v541
        %v629 = vunpack.c.l.b16 %v542
        %v630 = vunpack.c.l.b16 %v543
        %v631 = vunpack.c.l.b16 %v544
        %v632 = vunpack.c.l.b16 %v545
        %v633 = vunpack.c.l.b16 %v546
        %v634 = vunpack.c.l.b16 %v547
        %v635 = vunpack.c.l.b16 %v548
        %v636 = vpack.c.b16 %v621, %v620
        %v637 = vpack.c.b16 %v623, %v622
        %v638 = vpack.c.b16 %v625, %v624
        %v639 = vpack.c.b16 %v627, %v626
        %v640 = vpack.c.b16 %v629, %v628
        %v641 = vpack.c.b16 %v631, %v630
        %v642 = vpack.c.b16 %v633, %v632
        %v643 = vpack.c.b16 %v635, %v634
        %652 = vmatprep.subr.bf16.mxu0 0
        %653 = vmatpush1.bf16.msra.mxu0 %v636
        %654 = vmatprep.subr.bf16.mxu0 0
        %655 = vmatpush1.bf16.msra.mxu0 %v637
        %656 = vmatprep.subr.bf16.mxu0 0
        %657 = vmatpush1.bf16.msra.mxu0 %v638
        %658 = vmatprep.subr.bf16.mxu0 0
        %659 = vmatpush1.bf16.msra.mxu0 %v639
        %660 = vmatprep.subr.bf16.mxu0 0
        %661 = vmatpush1.bf16.msra.mxu0 %v640
        %662 = vmatprep.subr.bf16.mxu0 0
        %663 = vmatpush1.bf16.msra.mxu0 %v641
        %664 = vmatprep.subr.bf16.mxu0 0
        %665 = vmatpush1.bf16.msra.mxu0 %v642
        %666 = vmatprep.subr.bf16.mxu0 0
        %667 = vmatpush1.bf16.msra.mxu0 %v643
        %668 = vmatprep.subr.bf16.mxu0 0
        %669 = vmatpush1.bf16.msra.mxu0 0
        %670 = vmatprep.subr.bf16.mxu0 0
        %671 = vmatpush1.bf16.msra.mxu0 0
        %672 = vmatprep.subr.bf16.mxu0 0
        %673 = vmatpush1.bf16.msra.mxu0 0
        %674 = vmatprep.subr.bf16.mxu0 0
        %675 = vmatpush1.bf16.msra.mxu0 0
        %676 = vmatprep.subr.bf16.mxu0 0
        %677 = vmatpush1.bf16.msra.mxu0 0
        %678 = vmatprep.subr.bf16.mxu0 0
        %679 = vmatpush1.bf16.msra.mxu0 0
        %680 = vmatprep.subr.bf16.mxu0 0
        %681 = vmatpush1.bf16.msra.mxu0 0
        %682 = vmatprep.subr.bf16.mxu0 0
        %683 = vmatpush1.bf16.msra.mxu0 0
        %684 = vmatprep.mubr.bf16.mxu0 0
        %685 = vmatmul.mubr.bf16.gmra.mrb[0].mxu0 %v588
        %v686 = vpop.f32.mrb[0].mxu0
        %v687 = vadd.f32 %v554, %v686
        %v688 = vpop.f32.mrb[0].mxu0
        %v689 = vpop.f32.mrb[0].mxu0
        %v690 = vadd.f32 %v554, %v689
        %v691 = vpop.f32.mrb[0].mxu0
        %692 = vmatprep.mubr.bf16.mxu0 0
        %693 = vmatmul.mubr.bf16.gmra.mrb[0].mxu0 %v589
        %v694 = vpop.f32.mrb[0].mxu0
        %v695 = vadd.f32 %v554, %v694
        %v696 = vpop.f32.mrb[0].mxu0
        %v697 = vpop.f32.mrb[0].mxu0
        %v698 = vadd.f32 %v554, %v697
        %v699 = vpop.f32.mrb[0].mxu0
        %700 = vmatprep.mubr.bf16.mxu0 0
        %701 = vmatmul.mubr.bf16.gmra.mrb[0].mxu0 %v590
        %v702 = vpop.f32.mrb[0].mxu0
        %v703 = vadd.f32 %v554, %v702
        %v704 = vpop.f32.mrb[0].mxu0
        %v705 = vpop.f32.mrb[0].mxu0
        %v706 = vadd.f32 %v554, %v705
        %v707 = vpop.f32.mrb[0].mxu0
        %708 = vmatprep.mubr.bf16.mxu0 0
        %709 = vmatmul.mubr.bf16.gmra.mrb[0].mxu0 %v591
        %v710 = vpop.f32.mrb[0].mxu0
        %v711 = vadd.f32 %v554, %v710
        %v712 = vpop.f32.mrb[0].mxu0
        %v713 = vpop.f32.mrb[0].mxu0
        %v714 = vadd.f32 %v554, %v713
        %v715 = vpop.f32.mrb[0].mxu0
        %716 = vmatprep.mubr.bf16.mxu0 0
        %717 = vmatmul.mubr.bf16.gmra.mrb[0].mxu0 %v592
        %v718 = vpop.f32.mrb[0].mxu0
        %v719 = vadd.f32 %v554, %v718
        %v720 = vpop.f32.mrb[0].mxu0
        %v721 = vpop.f32.mrb[0].mxu0
        %v722 = vadd.f32 %v554, %v721
        %v723 = vpop.f32.mrb[0].mxu0
        %724 = vmatprep.mubr.bf16.mxu0 0
        %725 = vmatmul.mubr.bf16.gmra.mrb[0].mxu0 %v593
        %v726 = vpop.f32.mrb[0].mxu0
        %v727 = vadd.f32 %v554, %v726
        %v728 = vpop.f32.mrb[0].mxu0
        %v729 = vpop.f32.mrb[0].mxu0
        %v730 = vadd.f32 %v554, %v729
        %v731 = vpop.f32.mrb[0].mxu0
        %732 = vmatprep.mubr.bf16.mxu0 0
        %733 = vmatmul.mubr.bf16.gmra.mrb[0].mxu0 %v594
        %v734 = vpop.f32.mrb[0].mxu0
        %v735 = vadd.f32 %v554, %v734
        %v736 = vpop.f32.mrb[0].mxu0
        %v737 = vpop.f32.mrb[0].mxu0
        %v738 = vadd.f32 %v554, %v737
        %v739 = vpop.f32.mrb[0].mxu0
        %740 = vmatprep.mubr.bf16.mxu0 0
        %741 = vmatmul.mubr.bf16.gmra.mrb[0].mxu0 %v595
        %v742 = vpop.f32.mrb[0].mxu0
        %v743 = vadd.f32 %v554, %v742
        %v744 = vpop.f32.mrb[0].mxu0
        %v745 = vpop.f32.mrb[0].mxu0
        %v746 = vadd.f32 %v554, %v745
        %v747 = vpop.f32.mrb[0].mxu0
        %748 = vdwg.mxu0
        %v749 = vld [vmem:[%s5] sm:$0xf]
        %v750 = vld [vmem:[%s5 + $0x4] sm:$0xf]
        %v751 = vld [vmem:[%s5 + $0x8] sm:$0xf]
        %v752 = vld [vmem:[%s5 + $0xc] sm:$0xf]
        %v753 = vld [vmem:[%s5 + $0x10] sm:$0xf]
        %v754 = vld [vmem:[%s5 + $0x14] sm:$0xf]
        %v755 = vld [vmem:[%s5 + $0x18] sm:$0xf]
        %v756 = vld [vmem:[%s5 + $0x1c] sm:$0xf]
        %v757 = vld [vmem:[%s5 + $0x20] sm:$0xf]
        %v758 = vld [vmem:[%s5 + $0x24] sm:$0xf]
        %v759 = vld [vmem:[%s5 + $0x28] sm:$0xf]
        %v760 = vld [vmem:[%s5 + $0x2c] sm:$0xf]
        %v761 = vld [vmem:[%s5 + $0x30] sm:$0xf]
        %v762 = vld [vmem:[%s5 + $0x34] sm:$0xf]
        %v763 = vld [vmem:[%s5 + $0x38] sm:$0xf]
        %v764 = vld [vmem:[%s5 + $0x3c] sm:$0xf]
        %v765 = vld [vmem:[%s6] sm:$0x1]
        %v767 = vlaneseq
        %v768 = vshrl.u32 %v767, 7
        %v769 = vsub.s32 0, %v768
        %v770 = vrot.slane %v765, %v769
        %v804 = vunpack.c.l.b16 %v469
        %v805 = vunpack.c.l.b16 %v470
        %v806 = vunpack.c.l.b16 %v471
        %v807 = vunpack.c.l.b16 %v472
        %v808 = vunpack.c.l.b16 %v473
        %v809 = vunpack.c.l.b16 %v474
        %v810 = vunpack.c.l.b16 %v475
        %v811 = vunpack.c.l.b16 %v476
        %v812 = vunpack.c.l.b16 %v477
        %v813 = vunpack.c.l.b16 %v478
        %v814 = vunpack.c.l.b16 %v479
        %v815 = vunpack.c.l.b16 %v480
        %v816 = vunpack.c.l.b16 %v481
        %v817 = vunpack.c.l.b16 %v482
        %v818 = vunpack.c.l.b16 %v483
        %v819 = vunpack.c.l.b16 %v484
        %v820 = vunpack.c.l.b16 %v485
        %v821 = vunpack.c.l.b16 %v486
        %v822 = vunpack.c.l.b16 %v487
        %v823 = vunpack.c.l.b16 %v488
        %v824 = vunpack.c.l.b16 %v489
        %v825 = vunpack.c.l.b16 %v490
        %v826 = vunpack.c.l.b16 %v491
        %v827 = vunpack.c.l.b16 %v492
        %v828 = vunpack.c.l.b16 %v493
        %v829 = vunpack.c.l.b16 %v494
        %v830 = vunpack.c.l.b16 %v495
        %v831 = vunpack.c.l.b16 %v496
        %v832 = vunpack.c.l.b16 %v497
        %v833 = vunpack.c.l.b16 %v498
        %v834 = vunpack.c.l.b16 %v499
        %v835 = vunpack.c.l.b16 %v500
        %v836 = vpack.c.b16 %v805, %v804
        %v837 = vpack.c.b16 %v807, %v806
        %v838 = vpack.c.b16 %v809, %v808
        %v839 = vpack.c.b16 %v811, %v810
        %v840 = vpack.c.b16 %v813, %v812
        %v841 = vpack.c.b16 %v815, %v814
        %v842 = vpack.c.b16 %v817, %v816
        %v843 = vpack.c.b16 %v819, %v818
        %v844 = vpack.c.b16 %v821, %v820
        %v845 = vpack.c.b16 %v823, %v822
        %v846 = vpack.c.b16 %v825, %v824
        %v847 = vpack.c.b16 %v827, %v826
        %v848 = vpack.c.b16 %v829, %v828
        %v849 = vpack.c.b16 %v831, %v830
        %v850 = vpack.c.b16 %v833, %v832
        %v851 = vpack.c.b16 %v835, %v834
        %v884 = vunpack.c.l.b16 %v749
        %v885 = vunpack.c.l.b16 %v750
        %v886 = vunpack.c.l.b16 %v751
        %v887 = vunpack.c.l.b16 %v752
        %v888 = vunpack.c.l.b16 %v753
        %v889 = vunpack.c.l.b16 %v754
        %v890 = vunpack.c.l.b16 %v755
        %v891 = vunpack.c.l.b16 %v756
        %v892 = vunpack.c.l.b16 %v757
        %v893 = vunpack.c.l.b16 %v758
        %v894 = vunpack.c.l.b16 %v759
        %v895 = vunpack.c.l.b16 %v760
        %v896 = vunpack.c.l.b16 %v761
        %v897 = vunpack.c.l.b16 %v762
        %v898 = vunpack.c.l.b16 %v763
        %v899 = vunpack.c.l.b16 %v764
        %v900 = vpack.c.b16 %v885, %v884
        %v901 = vpack.c.b16 %v887, %v886
        %v902 = vpack.c.b16 %v889, %v888
        %v903 = vpack.c.b16 %v891, %v890
        %v904 = vpack.c.b16 %v893, %v892
        %v905 = vpack.c.b16 %v895, %v894
        %v906 = vpack.c.b16 %v897, %v896
        %v907 = vpack.c.b16 %v899, %v898
        %916 = vmatprep.subr.bf16.mxu0 0
        %917 = vmatpush1.bf16.msra.mxu0 %v900
        %918 = vmatprep.subr.bf16.mxu0 0
        %919 = vmatpush1.bf16.msra.mxu0 %v901
        %920 = vmatprep.subr.bf16.mxu0 0
        %921 = vmatpush1.bf16.msra.mxu0 %v902
        %922 = vmatprep.subr.bf16.mxu0 0
        %923 = vmatpush1.bf16.msra.mxu0 %v903
        %924 = vmatprep.subr.bf16.mxu0 0
        %925 = vmatpush1.bf16.msra.mxu0 %v904
        %926 = vmatprep.subr.bf16.mxu0 0
        %927 = vmatpush1.bf16.msra.mxu0 %v905
        %928 = vmatprep.subr.bf16.mxu0 0
        %929 = vmatpush1.bf16.msra.mxu0 %v906
        %930 = vmatprep.subr.bf16.mxu0 0
        %931 = vmatpush1.bf16.msra.mxu0 %v907
        %932 = vmatprep.subr.bf16.mxu0 0
        %933 = vmatpush1.bf16.msra.mxu0 0
        %934 = vmatprep.subr.bf16.mxu0 0
        %935 = vmatpush1.bf16.msra.mxu0 0
        %936 = vmatprep.subr.bf16.mxu0 0
        %937 = vmatpush1.bf16.msra.mxu0 0
        %938 = vmatprep.subr.bf16.mxu0 0
        %939 = vmatpush1.bf16.msra.mxu0 0
        %940 = vmatprep.subr.bf16.mxu0 0
        %941 = vmatpush1.bf16.msra.mxu0 0
        %942 = vmatprep.subr.bf16.mxu0 0
        %943 = vmatpush1.bf16.msra.mxu0 0
        %944 = vmatprep.subr.bf16.mxu0 0
        %945 = vmatpush1.bf16.msra.mxu0 0
        %946 = vmatprep.subr.bf16.mxu0 0
        %947 = vmatpush1.bf16.msra.mxu0 0
        %948 = vmatprep.mubr.bf16.mxu0 0
        %949 = vmatmul.mubr.bf16.gmra.mrb[0].mxu0 %v836
        %v950 = vpop.f32.mrb[0].mxu0
        %v951 = vadd.f32 %v770, %v950
        %v952 = vpop.f32.mrb[0].mxu0
        %v953 = vpop.f32.mrb[0].mxu0
        %v954 = vadd.f32 %v770, %v953
        %v955 = vpop.f32.mrb[0].mxu0
        %956 = vmatprep.mubr.bf16.mxu0 0
        %957 = vmatmul.mubr.bf16.gmra.mrb[0].mxu0 %v837
        %v958 = vpop.f32.mrb[0].mxu0
        %v959 = vadd.f32 %v770, %v958
        %v960 = vpop.f32.mrb[0].mxu0
        %v961 = vpop.f32.mrb[0].mxu0
        %v962 = vadd.f32 %v770, %v961
        %v963 = vpop.f32.mrb[0].mxu0
        %964 = vmatprep.mubr.bf16.mxu0 0
        %965 = vmatmul.mubr.bf16.gmra.mrb[0].mxu0 %v838
        %v966 = vpop.f32.mrb[0].mxu0
        %v967 = vadd.f32 %v770, %v966
        %v968 = vpop.f32.mrb[0].mxu0
        %v969 = vpop.f32.mrb[0].mxu0
        %v970 = vadd.f32 %v770, %v969
        %v971 = vpop.f32.mrb[0].mxu0
        %972 = vmatprep.mubr.bf16.mxu0 0
        %973 = vmatmul.mubr.bf16.gmra.mrb[0].mxu0 %v839
        %v974 = vpop.f32.mrb[0].mxu0
        %v975 = vadd.f32 %v770, %v974
        %v976 = vpop.f32.mrb[0].mxu0
        %v977 = vpop.f32.mrb[0].mxu0
        %v978 = vadd.f32 %v770, %v977
        %v979 = vpop.f32.mrb[0].mxu0
        %980 = vmatprep.mubr.bf16.mxu0 0
        %981 = vmatmul.mubr.bf16.gmra.mrb[0].mxu0 %v840
        %v982 = vpop.f32.mrb[0].mxu0
        %v983 = vadd.f32 %v770, %v982
        %v984 = vpop.f32.mrb[0].mxu0
        %v985 = vpop.f32.mrb[0].mxu0
        %v986 = vadd.f32 %v770, %v985
        %v987 = vpop.f32.mrb[0].mxu0
        %988 = vmatprep.mubr.bf16.mxu0 0
        %989 = vmatmul.mubr.bf16.gmra.mrb[0].mxu0 %v841
        %v990 = vpop.f32.mrb[0].mxu0
        %v991 = vadd.f32 %v770, %v990
        %v992 = vpop.f32.mrb[0].mxu0
        %v993 = vpop.f32.mrb[0].mxu0
        %v994 = vadd.f32 %v770, %v993
        %v995 = vpop.f32.mrb[0].mxu0
        %996 = vmatprep.mubr.bf16.mxu0 0
        %997 = vmatmul.mubr.bf16.gmra.mrb[0].mxu0 %v842
        %v998 = vpop.f32.mrb[0].mxu0
        %v999 = vadd.f32 %v770, %v998
        %v1000 = vpop.f32.mrb[0].mxu0
        %v1001 = vpop.f32.mrb[0].mxu0
        %v1002 = vadd.f32 %v770, %v1001
        %v1003 = vpop.f32.mrb[0].mxu0
        %1004 = vmatprep.mubr.bf16.mxu0 0
        %1005 = vmatmul.mubr.bf16.gmra.mrb[0].mxu0 %v843
        %v1006 = vpop.f32.mrb[0].mxu0
        %v1007 = vadd.f32 %v770, %v1006
        %v1008 = vpop.f32.mrb[0].mxu0
        %v1009 = vpop.f32.mrb[0].mxu0
        %v1010 = vadd.f32 %v770, %v1009
        %v1011 = vpop.f32.mrb[0].mxu0
        %1012 = vmatprep.mubr.bf16.mxu0 0
        %1013 = vmatmul.mubr.bf16.gmra.mrb[0].mxu0 %v844
        %v1014 = vpop.f32.mrb[0].mxu0
        %v1015 = vadd.f32 %v770, %v1014
        %v1016 = vpop.f32.mrb[0].mxu0
        %v1017 = vpop.f32.mrb[0].mxu0
        %v1018 = vadd.f32 %v770, %v1017
        %v1019 = vpop.f32.mrb[0].mxu0
        %1020 = vmatprep.mubr.bf16.mxu0 0
        %1021 = vmatmul.mubr.bf16.gmra.mrb[0].mxu0 %v845
        %v1022 = vpop.f32.mrb[0].mxu0
        %v1023 = vadd.f32 %v770, %v1022
        %v1024 = vpop.f32.mrb[0].mxu0
        %v1025 = vpop.f32.mrb[0].mxu0
        %v1026 = vadd.f32 %v770, %v1025
        %v1027 = vpop.f32.mrb[0].mxu0
        %1028 = vmatprep.mubr.bf16.mxu0 0
        %1029 = vmatmul.mubr.bf16.gmra.mrb[0].mxu0 %v846
        %v1030 = vpop.f32.mrb[0].mxu0
        %v1031 = vadd.f32 %v770, %v1030
        %v1032 = vpop.f32.mrb[0].mxu0
        %v1033 = vpop.f32.mrb[0].mxu0
        %v1034 = vadd.f32 %v770, %v1033
        %v1035 = vpop.f32.mrb[0].mxu0
        %1036 = vmatprep.mubr.bf16.mxu0 0
        %1037 = vmatmul.mubr.bf16.gmra.mrb[0].mxu0 %v847
        %v1038 = vpop.f32.mrb[0].mxu0
        %v1039 = vadd.f32 %v770, %v1038
        %v1040 = vpop.f32.mrb[0].mxu0
        %v1041 = vpop.f32.mrb[0].mxu0
        %v1042 = vadd.f32 %v770, %v1041
        %v1043 = vpop.f32.mrb[0].mxu0
        %1044 = vmatprep.mubr.bf16.mxu0 0
        %1045 = vmatmul.mubr.bf16.gmra.mrb[0].mxu0 %v848
        %v1046 = vpop.f32.mrb[0].mxu0
        %v1047 = vadd.f32 %v770, %v1046
        %v1048 = vpop.f32.mrb[0].mxu0
        %v1049 = vpop.f32.mrb[0].mxu0
        %v1050 = vadd.f32 %v770, %v1049
        %v1051 = vpop.f32.mrb[0].mxu0
        %1052 = vmatprep.mubr.bf16.mxu0 0
        %1053 = vmatmul.mubr.bf16.gmra.mrb[0].mxu0 %v849
        %v1054 = vpop.f32.mrb[0].mxu0
        %v1055 = vadd.f32 %v770, %v1054
        %v1056 = vpop.f32.mrb[0].mxu0
        %v1057 = vpop.f32.mrb[0].mxu0
        %v1058 = vadd.f32 %v770, %v1057
        %v1059 = vpop.f32.mrb[0].mxu0
        %1060 = vmatprep.mubr.bf16.mxu0 0
        %1061 = vmatmul.mubr.bf16.gmra.mrb[0].mxu0 %v850
        %v1062 = vpop.f32.mrb[0].mxu0
        %v1063 = vadd.f32 %v770, %v1062
        %v1064 = vpop.f32.mrb[0].mxu0
        %v1065 = vpop.f32.mrb[0].mxu0
        %v1066 = vadd.f32 %v770, %v1065
        %v1067 = vpop.f32.mrb[0].mxu0
        %1068 = vmatprep.mubr.bf16.mxu0 0
        %1069 = vmatmul.mubr.bf16.gmra.mrb[0].mxu0 %v851
        %v1070 = vpop.f32.mrb[0].mxu0
        %v1071 = vadd.f32 %v770, %v1070
        %v1072 = vpop.f32.mrb[0].mxu0
        %v1073 = vpop.f32.mrb[0].mxu0
        %v1074 = vadd.f32 %v770, %v1073
        %v1075 = vpop.f32.mrb[0].mxu0
        %1076 = vdwg.mxu0
        %v1077 = vld [vmem:[%s7] sm:$0xf]
        %v1078 = vld [vmem:[%s7 + $0x4] sm:$0xf]
        %v1079 = vld [vmem:[%s7 + $0x8] sm:$0xf]
        %v1080 = vld [vmem:[%s7 + $0xc] sm:$0xf]
        %v1081 = vld [vmem:[%s7 + $0x10] sm:$0xf]
        %v1082 = vld [vmem:[%s7 + $0x14] sm:$0xf]
        %v1083 = vld [vmem:[%s7 + $0x18] sm:$0xf]
        %v1084 = vld [vmem:[%s7 + $0x1c] sm:$0xf]
        %v1085 = vld [vmem:[%s7 + $0x20] sm:$0xf]
        %v1086 = vld [vmem:[%s7 + $0x24] sm:$0xf]
        %v1087 = vld [vmem:[%s7 + $0x28] sm:$0xf]
        %v1088 = vld [vmem:[%s7 + $0x2c] sm:$0xf]
        %v1089 = vld [vmem:[%s7 + $0x30] sm:$0xf]
        %v1090 = vld [vmem:[%s7 + $0x34] sm:$0xf]
        %v1091 = vld [vmem:[%s7 + $0x38] sm:$0xf]
        %v1092 = vld [vmem:[%s7 + $0x3c] sm:$0xf]
        %v1093 = vld [vmem:[%s8] sm:$0x1]
        %v1095 = vlaneseq
        %v1096 = vshrl.u32 %v1095, 7
        %v1097 = vsub.s32 0, %v1096
        %v1098 = vrot.slane %v1093, %v1097
        %v1132 = vunpack.c.l.b16 %v501
        %v1133 = vunpack.c.l.b16 %v502
        %v1134 = vunpack.c.l.b16 %v503
        %v1135 = vunpack.c.l.b16 %v504
        %v1136 = vunpack.c.l.b16 %v505
        %v1137 = vunpack.c.l.b16 %v506
        %v1138 = vunpack.c.l.b16 %v507
        %v1139 = vunpack.c.l.b16 %v508
        %v1140 = vunpack.c.l.b16 %v509
        %v1141 = vunpack.c.l.b16 %v510
        %v1142 = vunpack.c.l.b16 %v511
        %v1143 = vunpack.c.l.b16 %v512
        %v1144 = vunpack.c.l.b16 %v513
        %v1145 = vunpack.c.l.b16 %v514
        %v1146 = vunpack.c.l.b16 %v515
        %v1147 = vunpack.c.l.b16 %v516
        %v1148 = vunpack.c.l.b16 %v517
        %v1149 = vunpack.c.l.b16 %v518
        %v1150 = vunpack.c.l.b16 %v519
        %v1151 = vunpack.c.l.b16 %v520
        %v1152 = vunpack.c.l.b16 %v521
        %v1153 = vunpack.c.l.b16 %v522
        %v1154 = vunpack.c.l.b16 %v523
        %v1155 = vunpack.c.l.b16 %v524
        %v1156 = vunpack.c.l.b16 %v525
        %v1157 = vunpack.c.l.b16 %v526
        %v1158 = vunpack.c.l.b16 %v527
        %v1159 = vunpack.c.l.b16 %v528
        %v1160 = vunpack.c.l.b16 %v529
        %v1161 = vunpack.c.l.b16 %v530
        %v1162 = vunpack.c.l.b16 %v531
        %v1163 = vunpack.c.l.b16 %v532
        %v1164 = vpack.c.b16 %v1133, %v1132
        %v1165 = vpack.c.b16 %v1135, %v1134
        %v1166 = vpack.c.b16 %v1137, %v1136
        %v1167 = vpack.c.b16 %v1139, %v1138
        %v1168 = vpack.c.b16 %v1141, %v1140
        %v1169 = vpack.c.b16 %v1143, %v1142
        %v1170 = vpack.c.b16 %v1145, %v1144
        %v1171 = vpack.c.b16 %v1147, %v1146
        %v1172 = vpack.c.b16 %v1149, %v1148
        %v1173 = vpack.c.b16 %v1151, %v1150
        %v1174 = vpack.c.b16 %v1153, %v1152
        %v1175 = vpack.c.b16 %v1155, %v1154
        %v1176 = vpack.c.b16 %v1157, %v1156
        %v1177 = vpack.c.b16 %v1159, %v1158
        %v1178 = vpack.c.b16 %v1161, %v1160
        %v1179 = vpack.c.b16 %v1163, %v1162
        %v1212 = vunpack.c.l.b16 %v1077
        %v1213 = vunpack.c.l.b16 %v1078
        %v1214 = vunpack.c.l.b16 %v1079
        %v1215 = vunpack.c.l.b16 %v1080
        %v1216 = vunpack.c.l.b16 %v1081
        %v1217 = vunpack.c.l.b16 %v1082
        %v1218 = vunpack.c.l.b16 %v1083
        %v1219 = vunpack.c.l.b16 %v1084
        %v1220 = vunpack.c.l.b16 %v1085
        %v1221 = vunpack.c.l.b16 %v1086
        %v1222 = vunpack.c.l.b16 %v1087
        %v1223 = vunpack.c.l.b16 %v1088
        %v1224 = vunpack.c.l.b16 %v1089
        %v1225 = vunpack.c.l.b16 %v1090
        %v1226 = vunpack.c.l.b16 %v1091
        %v1227 = vunpack.c.l.b16 %v1092
        %v1228 = vpack.c.b16 %v1213, %v1212
        %v1229 = vpack.c.b16 %v1215, %v1214
        %v1230 = vpack.c.b16 %v1217, %v1216
        %v1231 = vpack.c.b16 %v1219, %v1218
        %v1232 = vpack.c.b16 %v1221, %v1220
        %v1233 = vpack.c.b16 %v1223, %v1222
        %v1234 = vpack.c.b16 %v1225, %v1224
        %v1235 = vpack.c.b16 %v1227, %v1226
        %1244 = vmatprep.subr.bf16.mxu0 0
        %1245 = vmatpush1.bf16.msra.mxu0 %v1228
        %1246 = vmatprep.subr.bf16.mxu0 0
        %1247 = vmatpush1.bf16.msra.mxu0 %v1229
        %1248 = vmatprep.subr.bf16.mxu0 0
        %1249 = vmatpush1.bf16.msra.mxu0 %v1230
        %1250 = vmatprep.subr.bf16.mxu0 0
        %1251 = vmatpush1.bf16.msra.mxu0 %v1231
        %1252 = vmatprep.subr.bf16.mxu0 0
        %1253 = vmatpush1.bf16.msra.mxu0 %v1232
        %1254 = vmatprep.subr.bf16.mxu0 0
        %1255 = vmatpush1.bf16.msra.mxu0 %v1233
        %1256 = vmatprep.subr.bf16.mxu0 0
        %1257 = vmatpush1.bf16.msra.mxu0 %v1234
        %1258 = vmatprep.subr.bf16.mxu0 0
        %1259 = vmatpush1.bf16.msra.mxu0 %v1235
        %1260 = vmatprep.subr.bf16.mxu0 0
        %1261 = vmatpush1.bf16.msra.mxu0 0
        %1262 = vmatprep.subr.bf16.mxu0 0
        %1263 = vmatpush1.bf16.msra.mxu0 0
        %1264 = vmatprep.subr.bf16.mxu0 0
        %1265 = vmatpush1.bf16.msra.mxu0 0
        %1266 = vmatprep.subr.bf16.mxu0 0
        %1267 = vmatpush1.bf16.msra.mxu0 0
        %1268 = vmatprep.subr.bf16.mxu0 0
        %1269 = vmatpush1.bf16.msra.mxu0 0
        %1270 = vmatprep.subr.bf16.mxu0 0
        %1271 = vmatpush1.bf16.msra.mxu0 0
        %1272 = vmatprep.subr.bf16.mxu0 0
        %1273 = vmatpush1.bf16.msra.mxu0 0
        %1274 = vmatprep.subr.bf16.mxu0 0
        %1275 = vmatpush1.bf16.msra.mxu0 0
        %1276 = vmatprep.mubr.bf16.mxu0 0
        %1277 = vmatmul.mubr.bf16.gmra.mrb[0].mxu0 %v1164
        %v1278 = vpop.f32.mrb[0].mxu0
        %v1279 = vadd.f32 %v1098, %v1278
        %v1280 = vpop.f32.mrb[0].mxu0
        %v1281 = vpop.f32.mrb[0].mxu0
        %v1282 = vadd.f32 %v1098, %v1281
        %v1283 = vpop.f32.mrb[0].mxu0
        %1284 = vmatprep.mubr.bf16.mxu0 0
        %1285 = vmatmul.mubr.bf16.gmra.mrb[0].mxu0 %v1165
        %v1286 = vpop.f32.mrb[0].mxu0
        %v1287 = vadd.f32 %v1098, %v1286
        %v1288 = vpop.f32.mrb[0].mxu0
        %v1289 = vpop.f32.mrb[0].mxu0
        %v1290 = vadd.f32 %v1098, %v1289
        %v1291 = vpop.f32.mrb[0].mxu0
        %1292 = vmatprep.mubr.bf16.mxu0 0
        %1293 = vmatmul.mubr.bf16.gmra.mrb[0].mxu0 %v1166
        %v1294 = vpop.f32.mrb[0].mxu0
        %v1295 = vadd.f32 %v1098, %v1294
        %v1296 = vpop.f32.mrb[0].mxu0
        %v1297 = vpop.f32.mrb[0].mxu0
        %v1298 = vadd.f32 %v1098, %v1297
        %v1299 = vpop.f32.mrb[0].mxu0
        %1300 = vmatprep.mubr.bf16.mxu0 0
        %1301 = vmatmul.mubr.bf16.gmra.mrb[0].mxu0 %v1167
        %v1302 = vpop.f32.mrb[0].mxu0
        %v1303 = vadd.f32 %v1098, %v1302
        %v1304 = vpop.f32.mrb[0].mxu0
        %v1305 = vpop.f32.mrb[0].mxu0
        %v1306 = vadd.f32 %v1098, %v1305
        %v1307 = vpop.f32.mrb[0].mxu0
        %1308 = vmatprep.mubr.bf16.mxu0 0
        %1309 = vmatmul.mubr.bf16.gmra.mrb[0].mxu0 %v1168
        %v1310 = vpop.f32.mrb[0].mxu0
        %v1311 = vadd.f32 %v1098, %v1310
        %v1312 = vpop.f32.mrb[0].mxu0
        %v1313 = vpop.f32.mrb[0].mxu0
        %v1314 = vadd.f32 %v1098, %v1313
        %v1315 = vpop.f32.mrb[0].mxu0
        %1316 = vmatprep.mubr.bf16.mxu0 0
        %1317 = vmatmul.mubr.bf16.gmra.mrb[0].mxu0 %v1169
        %v1318 = vpop.f32.mrb[0].mxu0
        %v1319 = vadd.f32 %v1098, %v1318
        %v1320 = vpop.f32.mrb[0].mxu0
        %v1321 = vpop.f32.mrb[0].mxu0
        %v1322 = vadd.f32 %v1098, %v1321
        %v1323 = vpop.f32.mrb[0].mxu0
        %1324 = vmatprep.mubr.bf16.mxu0 0
        %1325 = vmatmul.mubr.bf16.gmra.mrb[0].mxu0 %v1170
        %v1326 = vpop.f32.mrb[0].mxu0
        %v1327 = vadd.f32 %v1098, %v1326
        %v1328 = vpop.f32.mrb[0].mxu0
        %v1329 = vpop.f32.mrb[0].mxu0
        %v1330 = vadd.f32 %v1098, %v1329
        %v1331 = vpop.f32.mrb[0].mxu0
        %1332 = vmatprep.mubr.bf16.mxu0 0
        %1333 = vmatmul.mubr.bf16.gmra.mrb[0].mxu0 %v1171
        %v1334 = vpop.f32.mrb[0].mxu0
        %v1335 = vadd.f32 %v1098, %v1334
        %v1336 = vpop.f32.mrb[0].mxu0
        %v1337 = vpop.f32.mrb[0].mxu0
        %v1338 = vadd.f32 %v1098, %v1337
        %v1339 = vpop.f32.mrb[0].mxu0
        %1340 = vmatprep.mubr.bf16.mxu0 0
        %1341 = vmatmul.mubr.bf16.gmra.mrb[0].mxu0 %v1172
        %v1342 = vpop.f32.mrb[0].mxu0
        %v1343 = vadd.f32 %v1098, %v1342
        %v1344 = vpop.f32.mrb[0].mxu0
        %v1345 = vpop.f32.mrb[0].mxu0
        %v1346 = vadd.f32 %v1098, %v1345
        %v1347 = vpop.f32.mrb[0].mxu0
        %1348 = vmatprep.mubr.bf16.mxu0 0
        %1349 = vmatmul.mubr.bf16.gmra.mrb[0].mxu0 %v1173
        %v1350 = vpop.f32.mrb[0].mxu0
        %v1351 = vadd.f32 %v1098, %v1350
        %v1352 = vpop.f32.mrb[0].mxu0
        %v1353 = vpop.f32.mrb[0].mxu0
        %v1354 = vadd.f32 %v1098, %v1353
        %v1355 = vpop.f32.mrb[0].mxu0
        %1356 = vmatprep.mubr.bf16.mxu0 0
        %1357 = vmatmul.mubr.bf16.gmra.mrb[0].mxu0 %v1174
        %v1358 = vpop.f32.mrb[0].mxu0
        %v1359 = vadd.f32 %v1098, %v1358
        %v1360 = vpop.f32.mrb[0].mxu0
        %v1361 = vpop.f32.mrb[0].mxu0
        %v1362 = vadd.f32 %v1098, %v1361
        %v1363 = vpop.f32.mrb[0].mxu0
        %1364 = vmatprep.mubr.bf16.mxu0 0
        %1365 = vmatmul.mubr.bf16.gmra.mrb[0].mxu0 %v1175
        %v1366 = vpop.f32.mrb[0].mxu0
        %v1367 = vadd.f32 %v1098, %v1366
        %v1368 = vpop.f32.mrb[0].mxu0
        %v1369 = vpop.f32.mrb[0].mxu0
        %v1370 = vadd.f32 %v1098, %v1369
        %v1371 = vpop.f32.mrb[0].mxu0
        %1372 = vmatprep.mubr.bf16.mxu0 0
        %1373 = vmatmul.mubr.bf16.gmra.mrb[0].mxu0 %v1176
        %v1374 = vpop.f32.mrb[0].mxu0
        %v1375 = vadd.f32 %v1098, %v1374
        %v1376 = vpop.f32.mrb[0].mxu0
        %v1377 = vpop.f32.mrb[0].mxu0
        %v1378 = vadd.f32 %v1098, %v1377
        %v1379 = vpop.f32.mrb[0].mxu0
        %1380 = vmatprep.mubr.bf16.mxu0 0
        %1381 = vmatmul.mubr.bf16.gmra.mrb[0].mxu0 %v1177
        %v1382 = vpop.f32.mrb[0].mxu0
        %v1383 = vadd.f32 %v1098, %v1382
        %v1384 = vpop.f32.mrb[0].mxu0
        %v1385 = vpop.f32.mrb[0].mxu0
        %v1386 = vadd.f32 %v1098, %v1385
        %v1387 = vpop.f32.mrb[0].mxu0
        %1388 = vmatprep.mubr.bf16.mxu0 0
        %1389 = vmatmul.mubr.bf16.gmra.mrb[0].mxu0 %v1178
        %v1390 = vpop.f32.mrb[0].mxu0
        %v1391 = vadd.f32 %v1098, %v1390
        %v1392 = vpop.f32.mrb[0].mxu0
        %v1393 = vpop.f32.mrb[0].mxu0
        %v1394 = vadd.f32 %v1098, %v1393
        %v1395 = vpop.f32.mrb[0].mxu0
        %1396 = vmatprep.mubr.bf16.mxu0 0
        %1397 = vmatmul.mubr.bf16.gmra.mrb[0].mxu0 %v1179
        %v1398 = vpop.f32.mrb[0].mxu0
        %v1399 = vadd.f32 %v1098, %v1398
        %v1400 = vpop.f32.mrb[0].mxu0
        %v1401 = vpop.f32.mrb[0].mxu0
        %v1402 = vadd.f32 %v1098, %v1401
        %v1403 = vpop.f32.mrb[0].mxu0
        %1404 = vdwg.mxu0
        %v1405 = vpack.c.bf16 %v690, %v687
        %v1406 = vpack.c.bf16 %v698, %v695
        %v1407 = vpack.c.bf16 %v706, %v703
        %v1408 = vpack.c.bf16 %v714, %v711
        %v1409 = vpack.c.bf16 %v722, %v719
        %v1410 = vpack.c.bf16 %v730, %v727
        %v1411 = vpack.c.bf16 %v738, %v735
        %v1412 = vpack.c.bf16 %v746, %v743
        %v1413 = vpack.c.bf16 %v954, %v951
        %v1414 = vpack.c.bf16 %v962, %v959
        %v1415 = vpack.c.bf16 %v970, %v967
        %v1416 = vpack.c.bf16 %v978, %v975
        %v1417 = vpack.c.bf16 %v986, %v983
        %v1418 = vpack.c.bf16 %v994, %v991
        %v1419 = vpack.c.bf16 %v1002, %v999
        %v1420 = vpack.c.bf16 %v1010, %v1007
        %v1421 = vpack.c.bf16 %v1018, %v1015
        %v1422 = vpack.c.bf16 %v1026, %v1023
        %v1423 = vpack.c.bf16 %v1034, %v1031
        %v1424 = vpack.c.bf16 %v1042, %v1039
        %v1425 = vpack.c.bf16 %v1050, %v1047
        %v1426 = vpack.c.bf16 %v1058, %v1055
        %v1427 = vpack.c.bf16 %v1066, %v1063
        %v1428 = vpack.c.bf16 %v1074, %v1071
        %vm1429 = vcmask 523264
        %v1431 = vsel %vm1429, %v1405, 0
        %v1434 = vsel %vm1429, %v1406, 0
        %v1437 = vsel %vm1429, %v1407, 0
        %v1440 = vsel %vm1429, %v1408, 0
        %v1443 = vsel %vm1429, %v1409, 0
        %v1446 = vsel %vm1429, %v1410, 0
        %v1449 = vsel %vm1429, %v1411, 0
        %v1452 = vsel %vm1429, %v1412, 0
        %v1455 = vsel %vm1429, %v1413, 0
        %v1458 = vsel %vm1429, %v1414, 0
        %v1461 = vsel %vm1429, %v1415, 0
        %v1464 = vsel %vm1429, %v1416, 0
        %v1467 = vsel %vm1429, %v1417, 0
        %v1470 = vsel %vm1429, %v1418, 0
        %v1473 = vsel %vm1429, %v1419, 0
        %v1476 = vsel %vm1429, %v1420, 0
        %v1479 = vsel %vm1429, %v1421, 0
        %v1482 = vsel %vm1429, %v1422, 0
        %v1485 = vsel %vm1429, %v1423, 0
        %v1488 = vsel %vm1429, %v1424, 0
        %v1491 = vsel %vm1429, %v1425, 0
        %v1494 = vsel %vm1429, %v1426, 0
        %v1497 = vsel %vm1429, %v1427, 0
        %v1500 = vsel %vm1429, %v1428, 0
        %1502 = vmatprep.subr.bf16.mxu0 0
        %1503 = vmatpush1.bf16.xpose.msra.mxu0 %v1455
        %1504 = vmatprep.subr.bf16.mxu0 0
        %1505 = vmatpush1.bf16.xpose.msra.mxu0 %v1458
        %1506 = vmatprep.subr.bf16.mxu0 0
        %1507 = vmatpush1.bf16.xpose.msra.mxu0 %v1461
        %1508 = vmatprep.subr.bf16.mxu0 0
        %1509 = vmatpush1.bf16.xpose.msra.mxu0 %v1464
        %1510 = vmatprep.subr.bf16.mxu0 0
        %1511 = vmatpush1.bf16.xpose.msra.mxu0 %v1467
        %1512 = vmatprep.subr.bf16.mxu0 0
        %1513 = vmatpush1.bf16.xpose.msra.mxu0 %v1470
        %1514 = vmatprep.subr.bf16.mxu0 0
        %1515 = vmatpush1.bf16.xpose.msra.mxu0 %v1473
        %1516 = vmatprep.subr.bf16.mxu0 0
        %1517 = vmatpush1.bf16.xpose.msra.mxu0 %v1476
        %1518 = vmatprep.subr.bf16.mxu0 0
        %1519 = vmatpush1.bf16.xpose.msra.mxu0 %v1479
        %1520 = vmatprep.subr.bf16.mxu0 0
        %1521 = vmatpush1.bf16.xpose.msra.mxu0 %v1482
        %1522 = vmatprep.subr.bf16.mxu0 0
        %1523 = vmatpush1.bf16.xpose.msra.mxu0 %v1485
        %1524 = vmatprep.subr.bf16.mxu0 0
        %1525 = vmatpush1.bf16.xpose.msra.mxu0 %v1488
        %1526 = vmatprep.subr.bf16.mxu0 0
        %1527 = vmatpush1.bf16.xpose.msra.mxu0 %v1491
        %1528 = vmatprep.subr.bf16.mxu0 0
        %1529 = vmatpush1.bf16.xpose.msra.mxu0 %v1494
        %1530 = vmatprep.subr.bf16.mxu0 0
        %1531 = vmatpush1.bf16.xpose.msra.mxu0 %v1497
        %1532 = vmatprep.subr.bf16.mxu0 0
        %1533 = vmatpush1.bf16.xpose.msra.mxu0 %v1500
        %1534 = vmatprep.mubr.bf16.mxu0 0
        %1535 = vmatmul.mubr.bf16.gmra.mrb[0].mxu0 %v1431
        %v1536 = vpop.f32.mrb[0].mxu0
        %v1537 = vadd.f32 0.0, %v1536
        %v1538 = vpop.f32.mrb[0].mxu0
        %v1539 = vadd.f32 0.0, %v1538
        %v1540 = vpop.f32.mrb[0].mxu0
        %v1541 = vadd.f32 0.0, %v1540
        %v1542 = vpop.f32.mrb[0].mxu0
        %v1543 = vadd.f32 0.0, %v1542
        %1544 = vmatprep.mubr.bf16.mxu0 0
        %1545 = vmatmul.mubr.bf16.gmra.mrb[0].mxu0 %v1434
        %v1546 = vpop.f32.mrb[0].mxu0
        %v1547 = vadd.f32 0.0, %v1546
        %v1548 = vpop.f32.mrb[0].mxu0
        %v1549 = vadd.f32 0.0, %v1548
        %v1550 = vpop.f32.mrb[0].mxu0
        %v1551 = vadd.f32 0.0, %v1550
        %v1552 = vpop.f32.mrb[0].mxu0
        %v1553 = vadd.f32 0.0, %v1552
        %1554 = vmatprep.mubr.bf16.mxu0 0
        %1555 = vmatmul.mubr.bf16.gmra.mrb[0].mxu0 %v1437
        %v1556 = vpop.f32.mrb[0].mxu0
        %v1557 = vadd.f32 0.0, %v1556
        %v1558 = vpop.f32.mrb[0].mxu0
        %v1559 = vadd.f32 0.0, %v1558
        %v1560 = vpop.f32.mrb[0].mxu0
        %v1561 = vadd.f32 0.0, %v1560
        %v1562 = vpop.f32.mrb[0].mxu0
        %v1563 = vadd.f32 0.0, %v1562
        %1564 = vmatprep.mubr.bf16.mxu0 0
        %1565 = vmatmul.mubr.bf16.gmra.mrb[0].mxu0 %v1440
        %v1566 = vpop.f32.mrb[0].mxu0
        %v1567 = vadd.f32 0.0, %v1566
        %v1568 = vpop.f32.mrb[0].mxu0
        %v1569 = vadd.f32 0.0, %v1568
        %v1570 = vpop.f32.mrb[0].mxu0
        %v1571 = vadd.f32 0.0, %v1570
        %v1572 = vpop.f32.mrb[0].mxu0
        %v1573 = vadd.f32 0.0, %v1572
        %1574 = vmatprep.mubr.bf16.mxu0 0
        %1575 = vmatmul.mubr.bf16.gmra.mrb[0].mxu0 %v1443
        %v1576 = vpop.f32.mrb[0].mxu0
        %v1577 = vadd.f32 0.0, %v1576
        %v1578 = vpop.f32.mrb[0].mxu0
        %v1579 = vadd.f32 0.0, %v1578
        %v1580 = vpop.f32.mrb[0].mxu0
        %v1581 = vadd.f32 0.0, %v1580
        %v1582 = vpop.f32.mrb[0].mxu0
        %v1583 = vadd.f32 0.0, %v1582
        %1584 = vmatprep.mubr.bf16.mxu0 0
        %1585 = vmatmul.mubr.bf16.gmra.mrb[0].mxu0 %v1446
        %v1586 = vpop.f32.mrb[0].mxu0
        %v1587 = vadd.f32 0.0, %v1586
        %v1588 = vpop.f32.mrb[0].mxu0
        %v1589 = vadd.f32 0.0, %v1588
        %v1590 = vpop.f32.mrb[0].mxu0
        %v1591 = vadd.f32 0.0, %v1590
        %v1592 = vpop.f32.mrb[0].mxu0
        %v1593 = vadd.f32 0.0, %v1592
        %1594 = vmatprep.mubr.bf16.mxu0 0
        %1595 = vmatmul.mubr.bf16.gmra.mrb[0].mxu0 %v1449
        %v1596 = vpop.f32.mrb[0].mxu0
        %v1597 = vadd.f32 0.0, %v1596
        %v1598 = vpop.f32.mrb[0].mxu0
        %v1599 = vadd.f32 0.0, %v1598
        %v1600 = vpop.f32.mrb[0].mxu0
        %v1601 = vadd.f32 0.0, %v1600
        %v1602 = vpop.f32.mrb[0].mxu0
        %v1603 = vadd.f32 0.0, %v1602
        %1604 = vmatprep.mubr.bf16.mxu0 0
        %1605 = vmatmul.mubr.bf16.gmra.mrb[0].mxu0 %v1452
        %v1606 = vpop.f32.mrb[0].mxu0
        %v1607 = vadd.f32 0.0, %v1606
        %v1608 = vpop.f32.mrb[0].mxu0
        %v1609 = vadd.f32 0.0, %v1608
        %v1610 = vpop.f32.mrb[0].mxu0
        %v1611 = vadd.f32 0.0, %v1610
        %v1612 = vpop.f32.mrb[0].mxu0
        %v1613 = vadd.f32 0.0, %v1612
        %1614 = vdwg.mxu0
        %v1615 = vmax.f32 %v1537, %v1539
        %1616 = vmax.xlane.f32.xlu0 %v1615
        %v1617 = vpop.xlane.xlu0 %1616
        %v1618 = vmax.f32 %v1541, %v1543
        %1619 = vmax.xlane.f32.xlu0 %v1618
        %v1620 = vpop.xlane.xlu0 %1619
        %v1621 = vmax.f32 %v1547, %v1549
        %1622 = vmax.xlane.f32.xlu0 %v1621
        %v1623 = vpop.xlane.xlu0 %1622
        %v1624 = vmax.f32 %v1551, %v1553
        %1625 = vmax.xlane.f32.xlu0 %v1624
        %v1626 = vpop.xlane.xlu0 %1625
        %v1627 = vmax.f32 %v1557, %v1559
        %1628 = vmax.xlane.f32.xlu0 %v1627
        %v1629 = vpop.xlane.xlu0 %1628
        %v1630 = vmax.f32 %v1561, %v1563
        %1631 = vmax.xlane.f32.xlu0 %v1630
        %v1632 = vpop.xlane.xlu0 %1631
        %v1633 = vmax.f32 %v1567, %v1569
        %1634 = vmax.xlane.f32.xlu0 %v1633
        %v1635 = vpop.xlane.xlu0 %1634
        %v1636 = vmax.f32 %v1571, %v1573
        %1637 = vmax.xlane.f32.xlu0 %v1636
        %v1638 = vpop.xlane.xlu0 %1637
        %v1639 = vmax.f32 %v1577, %v1579
        %1640 = vmax.xlane.f32.xlu0 %v1639
        %v1641 = vpop.xlane.xlu0 %1640
        %v1642 = vmax.f32 %v1581, %v1583
        %1643 = vmax.xlane.f32.xlu0 %v1642
        %v1644 = vpop.xlane.xlu0 %1643
        %v1645 = vmax.f32 %v1587, %v1589
        %1646 = vmax.xlane.f32.xlu0 %v1645
        %v1647 = vpop.xlane.xlu0 %1646
        %v1648 = vmax.f32 %v1591, %v1593
        %1649 = vmax.xlane.f32.xlu0 %v1648
        %v1650 = vpop.xlane.xlu0 %1649
        %v1651 = vmax.f32 %v1597, %v1599
        %1652 = vmax.xlane.f32.xlu0 %v1651
        %v1653 = vpop.xlane.xlu0 %1652
        %v1654 = vmax.f32 %v1601, %v1603
        %1655 = vmax.xlane.f32.xlu0 %v1654
        %v1656 = vpop.xlane.xlu0 %1655
        %v1657 = vmax.f32 %v1607, %v1609
        %1658 = vmax.xlane.f32.xlu0 %v1657
        %v1659 = vpop.xlane.xlu0 %1658
        %v1660 = vmax.f32 %v1611, %v1613
        %1661 = vmax.xlane.f32.xlu0 %v1660
        %v1662 = vpop.xlane.xlu0 %1661
        %v1663 = vsub.f32 %v1537, %v1617
        %v1664 = vsub.f32 %v1539, %v1617
        %v1665 = vsub.f32 %v1541, %v1620
        %v1666 = vsub.f32 %v1543, %v1620
        %v1667 = vsub.f32 %v1547, %v1623
        %v1668 = vsub.f32 %v1549, %v1623
        %v1669 = vsub.f32 %v1551, %v1626
        %v1670 = vsub.f32 %v1553, %v1626
        %v1671 = vsub.f32 %v1557, %v1629
        %v1672 = vsub.f32 %v1559, %v1629
        %v1673 = vsub.f32 %v1561, %v1632
        %v1674 = vsub.f32 %v1563, %v1632
        %v1675 = vsub.f32 %v1567, %v1635
        %v1676 = vsub.f32 %v1569, %v1635
        %v1677 = vsub.f32 %v1571, %v1638
        %v1678 = vsub.f32 %v1573, %v1638
        %v1679 = vsub.f32 %v1577, %v1641
        %v1680 = vsub.f32 %v1579, %v1641
        %v1681 = vsub.f32 %v1581, %v1644
        %v1682 = vsub.f32 %v1583, %v1644
        %v1683 = vsub.f32 %v1587, %v1647
        %v1684 = vsub.f32 %v1589, %v1647
        %v1685 = vsub.f32 %v1591, %v1650
        %v1686 = vsub.f32 %v1593, %v1650
        %v1687 = vsub.f32 %v1597, %v1653
        %v1688 = vsub.f32 %v1599, %v1653
        %v1689 = vsub.f32 %v1601, %v1656
        %v1690 = vsub.f32 %v1603, %v1656
        %v1691 = vsub.f32 %v1607, %v1659
        %v1692 = vsub.f32 %v1609, %v1659
        %v1693 = vsub.f32 %v1611, %v1662
        %v1694 = vsub.f32 %v1613, %v1662
        %v1695 = vmul.f32 %v1663, 1.442695
        %v1696 = vpow.pop %v1695
        %v1697 = vmul.f32 %v1664, 1.442695
        %v1698 = vpow.pop %v1697
        %v1699 = vmul.f32 %v1665, 1.442695
        %v1700 = vpow.pop %v1699
        %v1701 = vmul.f32 %v1666, 1.442695
        %v1702 = vpow.pop %v1701
        %v1703 = vmul.f32 %v1667, 1.442695
        %v1704 = vpow.pop %v1703
        %v1705 = vmul.f32 %v1668, 1.442695
        %v1706 = vpow.pop %v1705
        %v1707 = vmul.f32 %v1669, 1.442695
        %v1708 = vpow.pop %v1707
        %v1709 = vmul.f32 %v1670, 1.442695
        %v1710 = vpow.pop %v1709
        %v1711 = vmul.f32 %v1671, 1.442695
        %v1712 = vpow.pop %v1711
        %v1713 = vmul.f32 %v1672, 1.442695
        %v1714 = vpow.pop %v1713
        %v1715 = vmul.f32 %v1673, 1.442695
        %v1716 = vpow.pop %v1715
        %v1717 = vmul.f32 %v1674, 1.442695
        %v1718 = vpow.pop %v1717
        %v1719 = vmul.f32 %v1675, 1.442695
        %v1720 = vpow.pop %v1719
        %v1721 = vmul.f32 %v1676, 1.442695
        %v1722 = vpow.pop %v1721
        %v1723 = vmul.f32 %v1677, 1.442695
        %v1724 = vpow.pop %v1723
        %v1725 = vmul.f32 %v1678, 1.442695
        %v1726 = vpow.pop %v1725
        %v1727 = vmul.f32 %v1679, 1.442695
        %v1728 = vpow.pop %v1727
        %v1729 = vmul.f32 %v1680, 1.442695
        %v1730 = vpow.pop %v1729
        %v1731 = vmul.f32 %v1681, 1.442695
        %v1732 = vpow.pop %v1731
        %v1733 = vmul.f32 %v1682, 1.442695
        %v1734 = vpow.pop %v1733
        %v1735 = vmul.f32 %v1683, 1.442695
        %v1736 = vpow.pop %v1735
        %v1737 = vmul.f32 %v1684, 1.442695
        %v1738 = vpow.pop %v1737
        %v1739 = vmul.f32 %v1685, 1.442695
        %v1740 = vpow.pop %v1739
        %v1741 = vmul.f32 %v1686, 1.442695
        %v1742 = vpow.pop %v1741
        %v1743 = vmul.f32 %v1687, 1.442695
        %v1744 = vpow.pop %v1743
        %v1745 = vmul.f32 %v1688, 1.442695
        %v1746 = vpow.pop %v1745
        %v1747 = vmul.f32 %v1689, 1.442695
        %v1748 = vpow.pop %v1747
        %v1749 = vmul.f32 %v1690, 1.442695
        %v1750 = vpow.pop %v1749
        %v1751 = vmul.f32 %v1691, 1.442695
        %v1752 = vpow.pop %v1751
        %v1753 = vmul.f32 %v1692, 1.442695
        %v1754 = vpow.pop %v1753
        %v1755 = vmul.f32 %v1693, 1.442695
        %v1756 = vpow.pop %v1755
        %v1757 = vmul.f32 %v1694, 1.442695
        %v1758 = vpow.pop %v1757
        %v1759 = vadd.f32 %v1696, %v1698
        %1760 = vadd.xlane.f32.xlu0 %v1759
        %v1761 = vpop.xlane.xlu0 %1760
        %v1762 = vadd.f32 %v1700, %v1702
        %1763 = vadd.xlane.f32.xlu0 %v1762
        %v1764 = vpop.xlane.xlu0 %1763
        %v1765 = vadd.f32 %v1704, %v1706
        %1766 = vadd.xlane.f32.xlu0 %v1765
        %v1767 = vpop.xlane.xlu0 %1766
        %v1768 = vadd.f32 %v1708, %v1710
        %1769 = vadd.xlane.f32.xlu0 %v1768
        %v1770 = vpop.xlane.xlu0 %1769
        %v1771 = vadd.f32 %v1712, %v1714
        %1772 = vadd.xlane.f32.xlu0 %v1771
        %v1773 = vpop.xlane.xlu0 %1772
        %v1774 = vadd.f32 %v1716, %v1718
        %1775 = vadd.xlane.f32.xlu0 %v1774
        %v1776 = vpop.xlane.xlu0 %1775
        %v1777 = vadd.f32 %v1720, %v1722
        %1778 = vadd.xlane.f32.xlu0 %v1777
        %v1779 = vpop.xlane.xlu0 %1778
        %v1780 = vadd.f32 %v1724, %v1726
        %1781 = vadd.xlane.f32.xlu0 %v1780
        %v1782 = vpop.xlane.xlu0 %1781
        %v1783 = vadd.f32 %v1728, %v1730
        %1784 = vadd.xlane.f32.xlu0 %v1783
        %v1785 = vpop.xlane.xlu0 %1784
        %v1786 = vadd.f32 %v1732, %v1734
        %1787 = vadd.xlane.f32.xlu0 %v1786
        %v1788 = vpop.xlane.xlu0 %1787
        %v1789 = vadd.f32 %v1736, %v1738
        %1790 = vadd.xlane.f32.xlu0 %v1789
        %v1791 = vpop.xlane.xlu0 %1790
        %v1792 = vadd.f32 %v1740, %v1742
        %1793 = vadd.xlane.f32.xlu0 %v1792
        %v1794 = vpop.xlane.xlu0 %1793
        %v1795 = vadd.f32 %v1744, %v1746
        %1796 = vadd.xlane.f32.xlu0 %v1795
        %v1797 = vpop.xlane.xlu0 %1796
        %v1798 = vadd.f32 %v1748, %v1750
        %1799 = vadd.xlane.f32.xlu0 %v1798
        %v1800 = vpop.xlane.xlu0 %1799
        %v1801 = vadd.f32 %v1752, %v1754
        %1802 = vadd.xlane.f32.xlu0 %v1801
        %v1803 = vpop.xlane.xlu0 %1802
        %v1804 = vadd.f32 %v1756, %v1758
        %1805 = vadd.xlane.f32.xlu0 %v1804
        %v1806 = vpop.xlane.xlu0 %1805
        %v1807 = vrcp.pop %v1761
        %v1808 = vrcp.pop %v1764
        %v1809 = vrcp.pop %v1767
        %v1810 = vrcp.pop %v1770
        %v1811 = vrcp.pop %v1773
        %v1812 = vrcp.pop %v1776
        %v1813 = vrcp.pop %v1779
        %v1814 = vrcp.pop %v1782
        %v1815 = vrcp.pop %v1785
        %v1816 = vrcp.pop %v1788
        %v1817 = vrcp.pop %v1791
        %v1818 = vrcp.pop %v1794
        %v1819 = vrcp.pop %v1797
        %v1820 = vrcp.pop %v1800
        %v1821 = vrcp.pop %v1803
        %v1822 = vrcp.pop %v1806
        %v1823 = vmul.f32 %v1696, %v1807
        %v1824 = vmul.f32 %v1698, %v1807
        %v1825 = vmul.f32 %v1700, %v1808
        %v1826 = vmul.f32 %v1702, %v1808
        %v1827 = vmul.f32 %v1704, %v1809
        %v1828 = vmul.f32 %v1706, %v1809
        %v1829 = vmul.f32 %v1708, %v1810
        %v1830 = vmul.f32 %v1710, %v1810
        %v1831 = vmul.f32 %v1712, %v1811
        %v1832 = vmul.f32 %v1714, %v1811
        %v1833 = vmul.f32 %v1716, %v1812
        %v1834 = vmul.f32 %v1718, %v1812
        %v1835 = vmul.f32 %v1720, %v1813
        %v1836 = vmul.f32 %v1722, %v1813
        %v1837 = vmul.f32 %v1724, %v1814
        %v1838 = vmul.f32 %v1726, %v1814
        %v1839 = vmul.f32 %v1728, %v1815
        %v1840 = vmul.f32 %v1730, %v1815
        %v1841 = vmul.f32 %v1732, %v1816
        %v1842 = vmul.f32 %v1734, %v1816
        %v1843 = vmul.f32 %v1736, %v1817
        %v1844 = vmul.f32 %v1738, %v1817
        %v1845 = vmul.f32 %v1740, %v1818
        %v1846 = vmul.f32 %v1742, %v1818
        %v1847 = vmul.f32 %v1744, %v1819
        %v1848 = vmul.f32 %v1746, %v1819
        %v1849 = vmul.f32 %v1748, %v1820
        %v1850 = vmul.f32 %v1750, %v1820
        %v1851 = vmul.f32 %v1752, %v1821
        %v1852 = vmul.f32 %v1754, %v1821
        %v1853 = vmul.f32 %v1756, %v1822
        %v1854 = vmul.f32 %v1758, %v1822
        %v1855 = vpack.c.bf16 %v1825, %v1823
        %v1856 = vpack.c.bf16 %v1826, %v1824
        %v1857 = vpack.c.bf16 %v1829, %v1827
        %v1858 = vpack.c.bf16 %v1830, %v1828
        %v1859 = vpack.c.bf16 %v1833, %v1831
        %v1860 = vpack.c.bf16 %v1834, %v1832
        %v1861 = vpack.c.bf16 %v1837, %v1835
        %v1862 = vpack.c.bf16 %v1838, %v1836
        %v1863 = vpack.c.bf16 %v1841, %v1839
        %v1864 = vpack.c.bf16 %v1842, %v1840
        %v1865 = vpack.c.bf16 %v1845, %v1843
        %v1866 = vpack.c.bf16 %v1846, %v1844
        %v1867 = vpack.c.bf16 %v1849, %v1847
        %v1868 = vpack.c.bf16 %v1850, %v1848
        %v1869 = vpack.c.bf16 %v1853, %v1851
        %v1870 = vpack.c.bf16 %v1854, %v1852
        %v1871 = vpack.c.bf16 %v1282, %v1279
        %v1872 = vpack.c.bf16 %v1290, %v1287
        %v1873 = vpack.c.bf16 %v1298, %v1295
        %v1874 = vpack.c.bf16 %v1306, %v1303
        %v1875 = vpack.c.bf16 %v1314, %v1311
        %v1876 = vpack.c.bf16 %v1322, %v1319
        %v1877 = vpack.c.bf16 %v1330, %v1327
        %v1878 = vpack.c.bf16 %v1338, %v1335
        %v1879 = vpack.c.bf16 %v1346, %v1343
        %v1880 = vpack.c.bf16 %v1354, %v1351
        %v1881 = vpack.c.bf16 %v1362, %v1359
        %v1882 = vpack.c.bf16 %v1370, %v1367
        %v1883 = vpack.c.bf16 %v1378, %v1375
        %v1884 = vpack.c.bf16 %v1386, %v1383
        %v1885 = vpack.c.bf16 %v1394, %v1391
        %v1886 = vpack.c.bf16 %v1402, %v1399
        %1887 = vmatprep.subr.bf16.mxu0 0
        %1888 = vmatpush1.bf16.msra.mxu0 %v1871
        %1889 = vmatprep.subr.bf16.mxu0 0
        %1890 = vmatpush1.bf16.msra.mxu0 %v1872
        %1891 = vmatprep.subr.bf16.mxu0 0
        %1892 = vmatpush1.bf16.msra.mxu0 %v1873
        %1893 = vmatprep.subr.bf16.mxu0 0
        %1894 = vmatpush1.bf16.msra.mxu0 %v1874
        %1895 = vmatprep.subr.bf16.mxu0 0
        %1896 = vmatpush1.bf16.msra.mxu0 %v1875
        %1897 = vmatprep.subr.bf16.mxu0 0
        %1898 = vmatpush1.bf16.msra.mxu0 %v1876
        %1899 = vmatprep.subr.bf16.mxu0 0
        %1900 = vmatpush1.bf16.msra.mxu0 %v1877
        %1901 = vmatprep.subr.bf16.mxu0 0
        %1902 = vmatpush1.bf16.msra.mxu0 %v1878
        %1903 = vmatprep.subr.bf16.mxu0 0
        %1904 = vmatpush1.bf16.msra.mxu0 %v1879
        %1905 = vmatprep.subr.bf16.mxu0 0
        %1906 = vmatpush1.bf16.msra.mxu0 %v1880
        %1907 = vmatprep.subr.bf16.mxu0 0
        %1908 = vmatpush1.bf16.msra.mxu0 %v1881
        %1909 = vmatprep.subr.bf16.mxu0 0
        %1910 = vmatpush1.bf16.msra.mxu0 %v1882
        %1911 = vmatprep.subr.bf16.mxu0 0
        %1912 = vmatpush1.bf16.msra.mxu0 %v1883
        %1913 = vmatprep.subr.bf16.mxu0 0
        %1914 = vmatpush1.bf16.msra.mxu0 %v1884
        %1915 = vmatprep.subr.bf16.mxu0 0
        %1916 = vmatpush1.bf16.msra.mxu0 %v1885
        %1917 = vmatprep.subr.bf16.mxu0 0
        %1918 = vmatpush1.bf16.msra.mxu0 %v1886
        %1919 = vmatprep.mubr.bf16.mxu0 %v1856
        %1920 = vmatmul.mubr.bf16.gmra.mrb[0].mxu0 %v1855
        %v1921 = vpop.f32.mrb[0].mxu0
        %v1922 = vadd.f32 0.0, %v1921
        %v1923 = vpop.f32.mrb[0].mxu0
        %v1924 = vpop.f32.mrb[0].mxu0
        %v1925 = vadd.f32 0.0, %v1924
        %v1926 = vpop.f32.mrb[0].mxu0
        %1927 = vmatprep.mubr.bf16.mxu0 %v1858
        %1928 = vmatmul.mubr.bf16.gmra.mrb[0].mxu0 %v1857
        %v1929 = vpop.f32.mrb[0].mxu0
        %v1930 = vadd.f32 0.0, %v1929
        %v1931 = vpop.f32.mrb[0].mxu0
        %v1932 = vpop.f32.mrb[0].mxu0
        %v1933 = vadd.f32 0.0, %v1932
        %v1934 = vpop.f32.mrb[0].mxu0
        %1935 = vmatprep.mubr.bf16.mxu0 %v1860
        %1936 = vmatmul.mubr.bf16.gmra.mrb[0].mxu0 %v1859
        %v1937 = vpop.f32.mrb[0].mxu0
        %v1938 = vadd.f32 0.0, %v1937
        %v1939 = vpop.f32.mrb[0].mxu0
        %v1940 = vpop.f32.mrb[0].mxu0
        %v1941 = vadd.f32 0.0, %v1940
        %v1942 = vpop.f32.mrb[0].mxu0
        %1943 = vmatprep.mubr.bf16.mxu0 %v1862
        %1944 = vmatmul.mubr.bf16.gmra.mrb[0].mxu0 %v1861
        %v1945 = vpop.f32.mrb[0].mxu0
        %v1946 = vadd.f32 0.0, %v1945
        %v1947 = vpop.f32.mrb[0].mxu0
        %v1948 = vpop.f32.mrb[0].mxu0
        %v1949 = vadd.f32 0.0, %v1948
        %v1950 = vpop.f32.mrb[0].mxu0
        %1951 = vmatprep.mubr.bf16.mxu0 %v1864
        %1952 = vmatmul.mubr.bf16.gmra.mrb[0].mxu0 %v1863
        %v1953 = vpop.f32.mrb[0].mxu0
        %v1954 = vadd.f32 0.0, %v1953
        %v1955 = vpop.f32.mrb[0].mxu0
        %v1956 = vpop.f32.mrb[0].mxu0
        %v1957 = vadd.f32 0.0, %v1956
        %v1958 = vpop.f32.mrb[0].mxu0
        %1959 = vmatprep.mubr.bf16.mxu0 %v1866
        %1960 = vmatmul.mubr.bf16.gmra.mrb[0].mxu0 %v1865
        %v1961 = vpop.f32.mrb[0].mxu0
        %v1962 = vadd.f32 0.0, %v1961
        %v1963 = vpop.f32.mrb[0].mxu0
        %v1964 = vpop.f32.mrb[0].mxu0
        %v1965 = vadd.f32 0.0, %v1964
        %v1966 = vpop.f32.mrb[0].mxu0
        %1967 = vmatprep.mubr.bf16.mxu0 %v1868
        %1968 = vmatmul.mubr.bf16.gmra.mrb[0].mxu0 %v1867
        %v1969 = vpop.f32.mrb[0].mxu0
        %v1970 = vadd.f32 0.0, %v1969
        %v1971 = vpop.f32.mrb[0].mxu0
        %v1972 = vpop.f32.mrb[0].mxu0
        %v1973 = vadd.f32 0.0, %v1972
        %v1974 = vpop.f32.mrb[0].mxu0
        %1975 = vmatprep.mubr.bf16.mxu0 %v1870
        %1976 = vmatmul.mubr.bf16.gmra.mrb[0].mxu0 %v1869
        %v1977 = vpop.f32.mrb[0].mxu0
        %v1978 = vadd.f32 0.0, %v1977
        %v1979 = vpop.f32.mrb[0].mxu0
        %v1980 = vpop.f32.mrb[0].mxu0
        %v1981 = vadd.f32 0.0, %v1980
        %v1982 = vpop.f32.mrb[0].mxu0
        %1983 = vdwg.mxu0
        %1984 = vst.msk [vmem:[%s450] sm:$0xff] %vm1429, %v1922
        %1985 = vst.msk [vmem:[%s450 + $0x8] sm:$0xff] %vm1429, %v1925
        %1986 = vst.msk [vmem:[%s450 + $0x10] sm:$0xff] %vm1429, %v1930
        %1987 = vst.msk [vmem:[%s450 + $0x18] sm:$0xff] %vm1429, %v1933
        %1988 = vst.msk [vmem:[%s450 + $0x20] sm:$0xff] %vm1429, %v1938
        %1989 = vst.msk [vmem:[%s450 + $0x28] sm:$0xff] %vm1429, %v1941
        %1990 = vst.msk [vmem:[%s450 + $0x30] sm:$0xff] %vm1429, %v1946
        %1991 = vst.msk [vmem:[%s450 + $0x38] sm:$0xff] %vm1429, %v1949
        %1992 = vst.msk [vmem:[%s450 + $0x40] sm:$0xff] %vm1429, %v1954
        %1993 = vst.msk [vmem:[%s450 + $0x48] sm:$0xff] %vm1429, %v1957
        %1994 = vst.msk [vmem:[%s450 + $0x50] sm:$0xff] %vm1429, %v1962
        %1995 = vst.msk [vmem:[%s450 + $0x58] sm:$0xff] %vm1429, %v1965
        %1996 = vst.msk [vmem:[%s450 + $0x60] sm:$0xff] %vm1429, %v1970
        %1997 = vst.msk [vmem:[%s450 + $0x68] sm:$0xff] %vm1429, %v1973
        %1998 = vst.msk [vmem:[%s450 + $0x70] sm:$0xff] %vm1429, %v1978
        %1999 = vst.msk [vmem:[%s450 + $0x78] sm:$0xff] %vm1429, %v1981
        %s2000 = smul.u32 16, %s31
        %p2001 = scmp.lt.s32.totalorder %s30, 1
        %s2002 = scalar_select %p2001, %s30, 1
        %p2003 = scmp.lt.s32.totalorder %s2000, 31
        %s2004 = scalar_select %p2003, %s2000, 31
        %s2005 = smul.addr %s2002, 32
        %s2006 = sadd.s32 %s2004, %s2005
        %s2007 = smul.addr %s2006, 8
        %s2008 = scalar_lea.vmem %s9, %s2007
        // Predicated region
        $region65: #{tpu_custom_call.1} parent=55 // pred_check
          %p2009 = pneg %p264
        $region66: #{tpu_custom_call.1} parent=55 // pred_check_branch
          %2011 = sbr.rel (%p2009) target = $region68
        $region67: #{tpu_custom_call.1} parent=55 // pred_region
          %s2012 = smul.u32 16, %s31
        $region68: #{tpu_custom_call.1} parent=55 // pred_fallthru
          _
      $region56: #{tpu_custom_call.1} parent=5 // pred_fallthru
        _
      %p2013 = scmp.le.s32.totalorder 2, %s21
      // Predicated region
      $region69: #{tpu_custom_call.1} parent=5 // pred_check
        %p2014 = pneg %p2013
      $region70: #{tpu_custom_call.1} parent=5 // pred_check_branch
        %2016 = sbr.rel (%p2014) target = $region72
      $region71: #{tpu_custom_call.1} parent=5 // pred_region
        %s2017 = ssub.s32 %s21, 2
        // Predicated region
        $region73: #{tpu_custom_call.1} parent=71 // pred_check
          %p2018 = pneg %p270
        $region74: #{tpu_custom_call.1} parent=71 // pred_check_branch
          %2020 = sbr.rel (%p2018) target = $region76
        $region75: #{tpu_custom_call.1} parent=71 // pred_region
          %s2021 = smul.u32 16, %s33
          %p2022 = scmp.lt.s32.totalorder %s32, 1
          %s2023 = scalar_select %p2022, %s32, 1
          %p2024 = scmp.lt.s32.totalorder %s2021, 31
          %s2025 = scalar_select %p2024, %s2021, 31
          %s2026 = smul.addr %s2023, 32
          %s2027 = sadd.s32 %s2025, %s2026
          %s2028 = smul.addr %s2027, 8
          %s2029 = scalar_lea.vmem %s9, %s2028
        $region76: #{tpu_custom_call.1} parent=71 // pred_fallthru
          _
      $region72: #{tpu_custom_call.1} parent=5 // pred_fallthru
        _
    $region6: #{tpu_custom_call.1} parent=1 // loop_footer
      %s25 = sadd.s32 1, %s21
    $region7: #{tpu_custom_call.1} parent=1 // loop_footer_branch
      %20 = sbr.rel target = $region3
    $region8: #{tpu_custom_call.1} parent=1 // loop_exit
      _
    %2030 = vsyncpa [#allocation3], 1
    %s2031 = scalar_lea.sflag [#allocation3], 1
    %2032 = vsyncpa %s2031, 1
    %2033 = vsyncpa [#allocation5], 1
    %s2034 = scalar_lea.sflag [#allocation5], 1
    %2035 = vsyncpa %s2034, 1

</llo_original>
